<compile_context>
chip_gen: v7x
topology: tpu7x:2x2x1
jax: 0.10.0
libtpu: 0.0.40
codegen_flags: <defaults>
</compile_context>

<pallas_src>
import jax
import jax.numpy as jnp
from jax import lax
from jax.experimental import pallas as pl
from jax.experimental.pallas import tpu as pltpu


def _lstm_tagger_kernel(ids_ref, emb_ref, w_ih_ref, w_hh_ref, b_lstm_ref,
                        w_tag_ref, b_tag_ref, out_ref):
    """Full LSTMTagger forward for one sentence, in a single invocation.

    Shapes (all VMEM-resident):
      ids_ref:   (T, 1)        int32
      emb_ref:   (V, E)        f32
      w_ih_ref:  (E, 4H)       f32   (pre-transposed)
      w_hh_ref:  (H, 4H)       f32   (pre-transposed)
      b_lstm_ref:(1, 4H)       f32   (b_ih + b_hh, fused)
      w_tag_ref: (H, tagset)   f32   (pre-transposed)
      b_tag_ref: (1, tagset)   f32
      out_ref:   (T, tagset)   f32
    """
    T = out_ref.shape[0]
    V = emb_ref.shape[0]
    H = w_hh_ref.shape[0]

    # --- 1) Embedding lookup as a one-hot MXU matmul -------------------------
    # one_hot: (T, V); xs = one_hot @ emb : (T, E).  V <= 128 so this is a
    # single vreg compare + one tiny matmul; no scalar-gated serial gather.
    # (No bounds guard: ids >= V silently yield a zero row, like UB in PyTorch.)
    iota_v = lax.broadcasted_iota(jnp.int32, (T, V), 1)
    one_hot = (ids_ref[...] == iota_v).astype(jnp.float32)
    xs = jnp.dot(one_hot, emb_ref[...], preferred_element_type=jnp.float32)

    # --- 2) Input projection, batched over the whole sequence (one matmul) ---
    #     gates_x = xs @ W_ih^T + (b_ih + b_hh)          -> (T, 4H)
    gates_x = jnp.dot(xs, w_ih_ref[...],
                      preferred_element_type=jnp.float32) + b_lstm_ref[...]

    def _sigmoid(x):
        # Exact tanh form: single EUP op per gate (EUP slot otherwise idle).
        return 0.5 * (jnp.tanh(0.5 * x) + 1.0)

    # --- 3) Sequential LSTM recurrence (h0 = c0 = 0, PyTorch default) --------
    w_hh_t = w_hh_ref[...]                               # hoisted load, (H,4H)
    h = jnp.zeros((1, H), jnp.float32)
    c = jnp.zeros((1, H), jnp.float32)
    h_steps = []
    for t in range(T):                                   # T is small & static
        gates = gates_x[t:t + 1, :] + jnp.dot(
            h, w_hh_t, preferred_element_type=jnp.float32)   # (1, 4H)
        # PyTorch gate order: input, forget, cell, output.
        i_g = _sigmoid(gates[:, 0 * H:1 * H])
        f_g = _sigmoid(gates[:, 1 * H:2 * H])
        g_g = jnp.tanh(gates[:, 2 * H:3 * H])
        o_g = _sigmoid(gates[:, 3 * H:4 * H])
        c = f_g * c + i_g * g_g
        h = o_g * jnp.tanh(c)
        h_steps.append(h)
    hs = jnp.concatenate(h_steps, axis=0)                # (T, H), register-resident

    # --- 4) hidden2tag projection for all timesteps + log_softmax(dim=1) -----
    tag_space = jnp.dot(hs, w_tag_ref[...],
                        preferred_element_type=jnp.float32) + b_tag_ref[...]
    m = jnp.max(tag_space, axis=-1, keepdims=True)
    shifted = tag_space - m
    lse = jnp.log(jnp.sum(jnp.exp(shifted), axis=-1, keepdims=True))
    out_ref[...] = (shifted - lse).astype(out_ref.dtype)


def lstm_tagger_forward(sentence, emb_table, w_ih, w_hh, b_ih, b_hh,
                        w_tag, b_tag):
    """LSTMTagger.forward.

    Args (PyTorch layouts):
      sentence:  (T,)            int token ids
      emb_table: (V, E)          float32  -- nn.Embedding.weight
      w_ih:      (4H, E)         float32  -- lstm.weight_ih_l0
      w_hh:      (4H, H)         float32  -- lstm.weight_hh_l0
      b_ih:      (4H,)           float32  -- lstm.bias_ih_l0
      b_hh:      (4H,)           float32  -- lstm.bias_hh_l0
      w_tag:     (tagset, H)     float32  -- hidden2tag.weight
      b_tag:     (tagset,)       float32  -- hidden2tag.bias
    Returns:
      (T, tagset) float32 log-softmax tag scores.
    """
    T = sentence.shape[0]
    H = w_hh.shape[1]
    tagset = w_tag.shape[0]

    vmem = pl.BlockSpec(memory_space=pltpu.MemorySpace.VMEM)

    return pl.pallas_call(
        _lstm_tagger_kernel,
        out_shape=jax.ShapeDtypeStruct((T, tagset), jnp.float32),
        in_specs=[
            vmem,   # token ids   (T, 1) int32
            vmem,   # embedding   (V, E)
            vmem,   # W_ih^T      (E, 4H)
            vmem,   # W_hh^T      (H, 4H)
            vmem,   # b_ih+b_hh   (1, 4H)
            vmem,   # W_tag^T     (H, tagset)
            vmem,   # b_tag       (1, tagset)
        ],
        out_specs=vmem,
    )(
        sentence.astype(jnp.int32).reshape(T, 1),
        emb_table,
        jnp.transpose(w_ih),                      # (E, 4H)   -- folded by XLA
        jnp.transpose(w_hh),                      # (H, 4H)
        (b_ih + b_hh).reshape(1, 4 * H),          # fused bias
        jnp.transpose(w_tag),                     # (H, tagset)
        b_tag.reshape(1, tagset),
    )


def _reference(sentence, emb_table, w_ih, w_hh, b_ih, b_hh, w_tag, b_tag):
    """Pure-JAX reference matching PyTorch LSTMTagger.forward."""
    H = w_hh.shape[1]
    x = emb_table[sentence]                               # (T, E)

    def cell(carry, x_t):
        h, c = carry
        gates = x_t @ w_ih.T + h @ w_hh.T + b_ih + b_hh
        i = jax.nn.sigmoid(gates[0 * H:1 * H])
        f = jax.nn.sigmoid(gates[1 * H:2 * H])
        g = jnp.tanh(gates[2 * H:3 * H])
        o = jax.nn.sigmoid(gates[3 * H:4 * H])
        c_new = f * c + i * g
        h_new = o * jnp.tanh(c_new)
        return (h_new, c_new), h_new

    init = (jnp.zeros((H,), jnp.float32), jnp.zeros((H,), jnp.float32))
    _, hs = jax.lax.scan(cell, init, x)                   # (T, H)
    tag_space = hs @ w_tag.T + b_tag                      # (T, tagset)
    return jax.nn.log_softmax(tag_space, axis=1)


if __name__ == "__main__":
    # Small shapes consistent with the module: seq=8, embed=32, hidden=32.
    EMBEDDING_DIM = 32
    HIDDEN_DIM = 32
    VOCAB_SIZE = 16
    TAGSET_SIZE = 8
    SEQ_LEN = 8

    key = jax.random.PRNGKey(0)
    ks, ke, kwi, kwh, kbi, kbh, kwt, kbt = jax.random.split(key, 8)

    sentence = jax.random.randint(ks, (SEQ_LEN,), 0, VOCAB_SIZE, dtype=jnp.int32)
    emb_table = jax.random.normal(ke, (VOCAB_SIZE, EMBEDDING_DIM), jnp.float32)

    bound = 1.0 / (HIDDEN_DIM ** 0.5)
    w_ih = jax.random.uniform(kwi, (4 * HIDDEN_DIM, EMBEDDING_DIM),
                              jnp.float32, -bound, bound)
    w_hh = jax.random.uniform(kwh, (4 * HIDDEN_DIM, HIDDEN_DIM),
                              jnp.float32, -bound, bound)
    b_ih = jax.random.uniform(kbi, (4 * HIDDEN_DIM,), jnp.float32, -bound, bound)
    b_hh = jax.random.uniform(kbh, (4 * HIDDEN_DIM,), jnp.float32, -bound, bound)
    w_tag = jax.random.uniform(kwt, (TAGSET_SIZE, HIDDEN_DIM),
                               jnp.float32, -bound, bound)
    b_tag = jax.random.uniform(kbt, (TAGSET_SIZE,), jnp.float32, -bound, bound)

    fwd = jax.jit(lstm_tagger_forward)
    out = fwd(sentence, emb_table, w_ih, w_hh, b_ih, b_hh, w_tag, b_tag)
    jax.block_until_ready(out)

    ref = _reference(sentence, emb_table, w_ih, w_hh, b_ih, b_hh, w_tag, b_tag)
    assert out.shape == (SEQ_LEN, TAGSET_SIZE)
    assert jnp.allclose(out, ref, atol=1e-5, rtol=1e-5), float(
        jnp.max(jnp.abs(out - ref)))

    print("KERNEL_OK")
</pallas_src>

<mosaic_0001>
module attributes {stable_mosaic.version = 11 : i64} {
  func.func @_lstm_tagger_kernel(%arg0: memref<8x1xi32, #tpu.memory_space<vmem>>, %arg1: memref<16x32xf32, #tpu.memory_space<vmem>>, %arg2: memref<32x128xf32, #tpu.memory_space<vmem>>, %arg3: memref<32x128xf32, #tpu.memory_space<vmem>>, %arg4: memref<1x128xf32, #tpu.memory_space<vmem>>, %arg5: memref<32x8xf32, #tpu.memory_space<vmem>>, %arg6: memref<1x8xf32, #tpu.memory_space<vmem>>, %arg7: memref<8x8xf32, #tpu.memory_space<vmem>>) attributes {dimension_semantics = [], scalar_prefetch = 0 : i64, scratch_operands = 0 : i64, tpu.core_type = #tpu.core_type<tc>} {
    %0 = tpu.iota {dimensions = array<i32: 1>} : vector<8x16xi32>
    %c0 = arith.constant 0 : index
    %c0_0 = arith.constant 0 : index
    %1 = vector.load %arg0[%c0, %c0_0] : memref<8x1xi32, #tpu.memory_space<vmem>>, vector<8x1xi32>
    %2 = vector.broadcast %1 : vector<8x1xi32> to vector<8x16xi32>
    %3 = arith.cmpi eq, %2, %0 : vector<8x16xi32>
    %4 = arith.extui %3 : vector<8x16xi1> to vector<8x16xi32>
    %5 = arith.sitofp %4 : vector<8x16xi32> to vector<8x16xf32>
    %c0_1 = arith.constant 0 : index
    %c0_2 = arith.constant 0 : index
    %6 = vector.load %arg1[%c0_1, %c0_2] : memref<16x32xf32, #tpu.memory_space<vmem>>, vector<16x32xf32>
    %cst = arith.constant dense<0.000000e+00> : vector<8x32xf32>
    %7 = tpu.matmul %5, %6, %cst {dimension_numbers = #tpu.dot_dimension_numbers<[1], [0], [0], [1], [0, 0, 1, 1], [], []>} : vector<8x16xf32>, vector<16x32xf32>, vector<8x32xf32> -> vector<8x32xf32>
    %c0_3 = arith.constant 0 : index
    %c0_4 = arith.constant 0 : index
    %8 = vector.load %arg2[%c0_3, %c0_4] : memref<32x128xf32, #tpu.memory_space<vmem>>, vector<32x128xf32>
    %cst_5 = arith.constant dense<0.000000e+00> : vector<8x128xf32>
    %9 = tpu.matmul %7, %8, %cst_5 {dimension_numbers = #tpu.dot_dimension_numbers<[1], [0], [0], [1], [0, 0, 1, 1], [], []>} : vector<8x32xf32>, vector<32x128xf32>, vector<8x128xf32> -> vector<8x128xf32>
    %c0_6 = arith.constant 0 : index
    %c0_7 = arith.constant 0 : index
    %10 = vector.load %arg4[%c0_6, %c0_7] : memref<1x128xf32, #tpu.memory_space<vmem>>, vector<1x128xf32>
    %11 = vector.broadcast %10 : vector<1x128xf32> to vector<8x128xf32>
    %12 = arith.addf %9, %11 : vector<8x128xf32>
    %c0_8 = arith.constant 0 : index
    %c0_9 = arith.constant 0 : index
    %13 = vector.load %arg3[%c0_8, %c0_9] : memref<32x128xf32, #tpu.memory_space<vmem>>, vector<32x128xf32>
    %cst_10 = arith.constant 0.000000e+00 : f32
    %14 = vector.broadcast %cst_10 : f32 to vector<1x32xf32>
    %cst_11 = arith.constant 0.000000e+00 : f32
    %15 = vector.broadcast %cst_11 : f32 to vector<1x32xf32>
    %16 = vector.extract_strided_slice %12 {offsets = [0, 0], sizes = [1, 128], strides = [1, 1]} : vector<8x128xf32> to vector<1x128xf32>
    %cst_12 = arith.constant dense<0.000000e+00> : vector<1x128xf32>
    %17 = tpu.matmul %14, %13, %cst_12 {dimension_numbers = #tpu.dot_dimension_numbers<[1], [0], [0], [1], [0, 0, 1, 1], [], []>} : vector<1x32xf32>, vector<32x128xf32>, vector<1x128xf32> -> vector<1x128xf32>
    %18 = arith.addf %16, %17 : vector<1x128xf32>
    %19 = vector.extract_strided_slice %18 {offsets = [0, 0], sizes = [1, 32], strides = [1, 1]} : vector<1x128xf32> to vector<1x32xf32>
    %cst_13 = arith.constant 5.000000e-01 : f32
    %20 = vector.broadcast %cst_13 : f32 to vector<1x32xf32>
    %21 = arith.mulf %20, %19 : vector<1x32xf32>
    %22 = math.tanh %21 : vector<1x32xf32>
    %cst_14 = arith.constant 1.000000e+00 : f32
    %23 = vector.broadcast %cst_14 : f32 to vector<1x32xf32>
    %24 = arith.addf %22, %23 : vector<1x32xf32>
    %cst_15 = arith.constant 5.000000e-01 : f32
    %25 = vector.broadcast %cst_15 : f32 to vector<1x32xf32>
    %26 = arith.mulf %25, %24 : vector<1x32xf32>
    %27 = vector.extract_strided_slice %18 {offsets = [0, 32], sizes = [1, 32], strides = [1, 1]} : vector<1x128xf32> to vector<1x32xf32>
    %cst_16 = arith.constant 5.000000e-01 : f32
    %28 = vector.broadcast %cst_16 : f32 to vector<1x32xf32>
    %29 = arith.mulf %28, %27 : vector<1x32xf32>
    %30 = math.tanh %29 : vector<1x32xf32>
    %cst_17 = arith.constant 1.000000e+00 : f32
    %31 = vector.broadcast %cst_17 : f32 to vector<1x32xf32>
    %32 = arith.addf %30, %31 : vector<1x32xf32>
    %cst_18 = arith.constant 5.000000e-01 : f32
    %33 = vector.broadcast %cst_18 : f32 to vector<1x32xf32>
    %34 = arith.mulf %33, %32 : vector<1x32xf32>
    %35 = vector.extract_strided_slice %18 {offsets = [0, 64], sizes = [1, 32], strides = [1, 1]} : vector<1x128xf32> to vector<1x32xf32>
    %36 = math.tanh %35 : vector<1x32xf32>
    %37 = vector.extract_strided_slice %18 {offsets = [0, 96], sizes = [1, 32], strides = [1, 1]} : vector<1x128xf32> to vector<1x32xf32>
    %cst_19 = arith.constant 5.000000e-01 : f32
    %38 = vector.broadcast %cst_19 : f32 to vector<1x32xf32>
    %39 = arith.mulf %38, %37 : vector<1x32xf32>
    %40 = math.tanh %39 : vector<1x32xf32>
    %cst_20 = arith.constant 1.000000e+00 : f32
    %41 = vector.broadcast %cst_20 : f32 to vector<1x32xf32>
    %42 = arith.addf %40, %41 : vector<1x32xf32>
    %cst_21 = arith.constant 5.000000e-01 : f32
    %43 = vector.broadcast %cst_21 : f32 to vector<1x32xf32>
    %44 = arith.mulf %43, %42 : vector<1x32xf32>
    %45 = arith.mulf %34, %15 : vector<1x32xf32>
    %46 = arith.mulf %26, %36 : vector<1x32xf32>
    %47 = arith.addf %45, %46 : vector<1x32xf32>
    %48 = math.tanh %47 : vector<1x32xf32>
    %49 = arith.mulf %44, %48 : vector<1x32xf32>
    %50 = vector.extract_strided_slice %12 {offsets = [1, 0], sizes = [1, 128], strides = [1, 1]} : vector<8x128xf32> to vector<1x128xf32>
    %cst_22 = arith.constant dense<0.000000e+00> : vector<1x128xf32>
    %51 = tpu.matmul %49, %13, %cst_22 {dimension_numbers = #tpu.dot_dimension_numbers<[1], [0], [0], [1], [0, 0, 1, 1], [], []>} : vector<1x32xf32>, vector<32x128xf32>, vector<1x128xf32> -> vector<1x128xf32>
    %52 = arith.addf %50, %51 : vector<1x128xf32>
    %53 = vector.extract_strided_slice %52 {offsets = [0, 0], sizes = [1, 32], strides = [1, 1]} : vector<1x128xf32> to vector<1x32xf32>
    %cst_23 = arith.constant 5.000000e-01 : f32
    %54 = vector.broadcast %cst_23 : f32 to vector<1x32xf32>
    %55 = arith.mulf %54, %53 : vector<1x32xf32>
    %56 = math.tanh %55 : vector<1x32xf32>
    %cst_24 = arith.constant 1.000000e+00 : f32
    %57 = vector.broadcast %cst_24 : f32 to vector<1x32xf32>
    %58 = arith.addf %56, %57 : vector<1x32xf32>
    %cst_25 = arith.constant 5.000000e-01 : f32
    %59 = vector.broadcast %cst_25 : f32 to vector<1x32xf32>
    %60 = arith.mulf %59, %58 : vector<1x32xf32>
    %61 = vector.extract_strided_slice %52 {offsets = [0, 32], sizes = [1, 32], strides = [1, 1]} : vector<1x128xf32> to vector<1x32xf32>
    %cst_26 = arith.constant 5.000000e-01 : f32
    %62 = vector.broadcast %cst_26 : f32 to vector<1x32xf32>
    %63 = arith.mulf %62, %61 : vector<1x32xf32>
    %64 = math.tanh %63 : vector<1x32xf32>
    %cst_27 = arith.constant 1.000000e+00 : f32
    %65 = vector.broadcast %cst_27 : f32 to vector<1x32xf32>
    %66 = arith.addf %64, %65 : vector<1x32xf32>
    %cst_28 = arith.constant 5.000000e-01 : f32
    %67 = vector.broadcast %cst_28 : f32 to vector<1x32xf32>
    %68 = arith.mulf %67, %66 : vector<1x32xf32>
    %69 = vector.extract_strided_slice %52 {offsets = [0, 64], sizes = [1, 32], strides = [1, 1]} : vector<1x128xf32> to vector<1x32xf32>
    %70 = math.tanh %69 : vector<1x32xf32>
    %71 = vector.extract_strided_slice %52 {offsets = [0, 96], sizes = [1, 32], strides = [1, 1]} : vector<1x128xf32> to vector<1x32xf32>
    %cst_29 = arith.constant 5.000000e-01 : f32
    %72 = vector.broadcast %cst_29 : f32 to vector<1x32xf32>
    %73 = arith.mulf %72, %71 : vector<1x32xf32>
    %74 = math.tanh %73 : vector<1x32xf32>
    %cst_30 = arith.constant 1.000000e+00 : f32
    %75 = vector.broadcast %cst_30 : f32 to vector<1x32xf32>
    %76 = arith.addf %74, %75 : vector<1x32xf32>
    %cst_31 = arith.constant 5.000000e-01 : f32
    %77 = vector.broadcast %cst_31 : f32 to vector<1x32xf32>
    %78 = arith.mulf %77, %76 : vector<1x32xf32>
    %79 = arith.mulf %68, %47 : vector<1x32xf32>
    %80 = arith.mulf %60, %70 : vector<1x32xf32>
    %81 = arith.addf %79, %80 : vector<1x32xf32>
    %82 = math.tanh %81 : vector<1x32xf32>
    %83 = arith.mulf %78, %82 : vector<1x32xf32>
    %84 = vector.extract_strided_slice %12 {offsets = [2, 0], sizes = [1, 128], strides = [1, 1]} : vector<8x128xf32> to vector<1x128xf32>
    %cst_32 = arith.constant dense<0.000000e+00> : vector<1x128xf32>
    %85 = tpu.matmul %83, %13, %cst_32 {dimension_numbers = #tpu.dot_dimension_numbers<[1], [0], [0], [1], [0, 0, 1, 1], [], []>} : vector<1x32xf32>, vector<32x128xf32>, vector<1x128xf32> -> vector<1x128xf32>
    %86 = arith.addf %84, %85 : vector<1x128xf32>
    %87 = vector.extract_strided_slice %86 {offsets = [0, 0], sizes = [1, 32], strides = [1, 1]} : vector<1x128xf32> to vector<1x32xf32>
    %cst_33 = arith.constant 5.000000e-01 : f32
    %88 = vector.broadcast %cst_33 : f32 to vector<1x32xf32>
    %89 = arith.mulf %88, %87 : vector<1x32xf32>
    %90 = math.tanh %89 : vector<1x32xf32>
    %cst_34 = arith.constant 1.000000e+00 : f32
    %91 = vector.broadcast %cst_34 : f32 to vector<1x32xf32>
    %92 = arith.addf %90, %91 : vector<1x32xf32>
    %cst_35 = arith.constant 5.000000e-01 : f32
    %93 = vector.broadcast %cst_35 : f32 to vector<1x32xf32>
    %94 = arith.mulf %93, %92 : vector<1x32xf32>
    %95 = vector.extract_strided_slice %86 {offsets = [0, 32], sizes = [1, 32], strides = [1, 1]} : vector<1x128xf32> to vector<1x32xf32>
    %cst_36 = arith.constant 5.000000e-01 : f32
    %96 = vector.broadcast %cst_36 : f32 to vector<1x32xf32>
    %97 = arith.mulf %96, %95 : vector<1x32xf32>
    %98 = math.tanh %97 : vector<1x32xf32>
    %cst_37 = arith.constant 1.000000e+00 : f32
    %99 = vector.broadcast %cst_37 : f32 to vector<1x32xf32>
    %100 = arith.addf %98, %99 : vector<1x32xf32>
    %cst_38 = arith.constant 5.000000e-01 : f32
    %101 = vector.broadcast %cst_38 : f32 to vector<1x32xf32>
    %102 = arith.mulf %101, %100 : vector<1x32xf32>
    %103 = vector.extract_strided_slice %86 {offsets = [0, 64], sizes = [1, 32], strides = [1, 1]} : vector<1x128xf32> to vector<1x32xf32>
    %104 = math.tanh %103 : vector<1x32xf32>
    %105 = vector.extract_strided_slice %86 {offsets = [0, 96], sizes = [1, 32], strides = [1, 1]} : vector<1x128xf32> to vector<1x32xf32>
    %cst_39 = arith.constant 5.000000e-01 : f32
    %106 = vector.broadcast %cst_39 : f32 to vector<1x32xf32>
    %107 = arith.mulf %106, %105 : vector<1x32xf32>
    %108 = math.tanh %107 : vector<1x32xf32>
    %cst_40 = arith.constant 1.000000e+00 : f32
    %109 = vector.broadcast %cst_40 : f32 to vector<1x32xf32>
    %110 = arith.addf %108, %109 : vector<1x32xf32>
    %cst_41 = arith.constant 5.000000e-01 : f32
    %111 = vector.broadcast %cst_41 : f32 to vector<1x32xf32>
    %112 = arith.mulf %111, %110 : vector<1x32xf32>
    %113 = arith.mulf %102, %81 : vector<1x32xf32>
    %114 = arith.mulf %94, %104 : vector<1x32xf32>
    %115 = arith.addf %113, %114 : vector<1x32xf32>
    %116 = math.tanh %115 : vector<1x32xf32>
    %117 = arith.mulf %112, %116 : vector<1x32xf32>
    %118 = vector.extract_strided_slice %12 {offsets = [3, 0], sizes = [1, 128], strides = [1, 1]} : vector<8x128xf32> to vector<1x128xf32>
    %cst_42 = arith.constant dense<0.000000e+00> : vector<1x128xf32>
    %119 = tpu.matmul %117, %13, %cst_42 {dimension_numbers = #tpu.dot_dimension_numbers<[1], [0], [0], [1], [0, 0, 1, 1], [], []>} : vector<1x32xf32>, vector<32x128xf32>, vector<1x128xf32> -> vector<1x128xf32>
    %120 = arith.addf %118, %119 : vector<1x128xf32>
    %121 = vector.extract_strided_slice %120 {offsets = [0, 0], sizes = [1, 32], strides = [1, 1]} : vector<1x128xf32> to vector<1x32xf32>
    %cst_43 = arith.constant 5.000000e-01 : f32
    %122 = vector.broadcast %cst_43 : f32 to vector<1x32xf32>
    %123 = arith.mulf %122, %121 : vector<1x32xf32>
    %124 = math.tanh %123 : vector<1x32xf32>
    %cst_44 = arith.constant 1.000000e+00 : f32
    %125 = vector.broadcast %cst_44 : f32 to vector<1x32xf32>
    %126 = arith.addf %124, %125 : vector<1x32xf32>
    %cst_45 = arith.constant 5.000000e-01 : f32
    %127 = vector.broadcast %cst_45 : f32 to vector<1x32xf32>
    %128 = arith.mulf %127, %126 : vector<1x32xf32>
    %129 = vector.extract_strided_slice %120 {offsets = [0, 32], sizes = [1, 32], strides = [1, 1]} : vector<1x128xf32> to vector<1x32xf32>
    %cst_46 = arith.constant 5.000000e-01 : f32
    %130 = vector.broadcast %cst_46 : f32 to vector<1x32xf32>
    %131 = arith.mulf %130, %129 : vector<1x32xf32>
    %132 = math.tanh %131 : vector<1x32xf32>
    %cst_47 = arith.constant 1.000000e+00 : f32
    %133 = vector.broadcast %cst_47 : f32 to vector<1x32xf32>
    %134 = arith.addf %132, %133 : vector<1x32xf32>
    %cst_48 = arith.constant 5.000000e-01 : f32
    %135 = vector.broadcast %cst_48 : f32 to vector<1x32xf32>
    %136 = arith.mulf %135, %134 : vector<1x32xf32>
    %137 = vector.extract_strided_slice %120 {offsets = [0, 64], sizes = [1, 32], strides = [1, 1]} : vector<1x128xf32> to vector<1x32xf32>
    %138 = math.tanh %137 : vector<1x32xf32>
    %139 = vector.extract_strided_slice %120 {offsets = [0, 96], sizes = [1, 32], strides = [1, 1]} : vector<1x128xf32> to vector<1x32xf32>
    %cst_49 = arith.constant 5.000000e-01 : f32
    %140 = vector.broadcast %cst_49 : f32 to vector<1x32xf32>
    %141 = arith.mulf %140, %139 : vector<1x32xf32>
    %142 = math.tanh %141 : vector<1x32xf32>
    %cst_50 = arith.constant 1.000000e+00 : f32
    %143 = vector.broadcast %cst_50 : f32 to vector<1x32xf32>
    %144 = arith.addf %142, %143 : vector<1x32xf32>
    %cst_51 = arith.constant 5.000000e-01 : f32
    %145 = vector.broadcast %cst_51 : f32 to vector<1x32xf32>
    %146 = arith.mulf %145, %144 : vector<1x32xf32>
    %147 = arith.mulf %136, %115 : vector<1x32xf32>
    %148 = arith.mulf %128, %138 : vector<1x32xf32>
    %149 = arith.addf %147, %148 : vector<1x32xf32>
    %150 = math.tanh %149 : vector<1x32xf32>
    %151 = arith.mulf %146, %150 : vector<1x32xf32>
    %152 = vector.extract_strided_slice %12 {offsets = [4, 0], sizes = [1, 128], strides = [1, 1]} : vector<8x128xf32> to vector<1x128xf32>
    %cst_52 = arith.constant dense<0.000000e+00> : vector<1x128xf32>
    %153 = tpu.matmul %151, %13, %cst_52 {dimension_numbers = #tpu.dot_dimension_numbers<[1], [0], [0], [1], [0, 0, 1, 1], [], []>} : vector<1x32xf32>, vector<32x128xf32>, vector<1x128xf32> -> vector<1x128xf32>
    %154 = arith.addf %152, %153 : vector<1x128xf32>
    %155 = vector.extract_strided_slice %154 {offsets = [0, 0], sizes = [1, 32], strides = [1, 1]} : vector<1x128xf32> to vector<1x32xf32>
    %cst_53 = arith.constant 5.000000e-01 : f32
    %156 = vector.broadcast %cst_53 : f32 to vector<1x32xf32>
    %157 = arith.mulf %156, %155 : vector<1x32xf32>
    %158 = math.tanh %157 : vector<1x32xf32>
    %cst_54 = arith.constant 1.000000e+00 : f32
    %159 = vector.broadcast %cst_54 : f32 to vector<1x32xf32>
    %160 = arith.addf %158, %159 : vector<1x32xf32>
    %cst_55 = arith.constant 5.000000e-01 : f32
    %161 = vector.broadcast %cst_55 : f32 to vector<1x32xf32>
    %162 = arith.mulf %161, %160 : vector<1x32xf32>
    %163 = vector.extract_strided_slice %154 {offsets = [0, 32], sizes = [1, 32], strides = [1, 1]} : vector<1x128xf32> to vector<1x32xf32>
    %cst_56 = arith.constant 5.000000e-01 : f32
    %164 = vector.broadcast %cst_56 : f32 to vector<1x32xf32>
    %165 = arith.mulf %164, %163 : vector<1x32xf32>
    %166 = math.tanh %165 : vector<1x32xf32>
    %cst_57 = arith.constant 1.000000e+00 : f32
    %167 = vector.broadcast %cst_57 : f32 to vector<1x32xf32>
    %168 = arith.addf %166, %167 : vector<1x32xf32>
    %cst_58 = arith.constant 5.000000e-01 : f32
    %169 = vector.broadcast %cst_58 : f32 to vector<1x32xf32>
    %170 = arith.mulf %169, %168 : vector<1x32xf32>
    %171 = vector.extract_strided_slice %154 {offsets = [0, 64], sizes = [1, 32], strides = [1, 1]} : vector<1x128xf32> to vector<1x32xf32>
    %172 = math.tanh %171 : vector<1x32xf32>
    %173 = vector.extract_strided_slice %154 {offsets = [0, 96], sizes = [1, 32], strides = [1, 1]} : vector<1x128xf32> to vector<1x32xf32>
    %cst_59 = arith.constant 5.000000e-01 : f32
    %174 = vector.broadcast %cst_59 : f32 to vector<1x32xf32>
    %175 = arith.mulf %174, %173 : vector<1x32xf32>
    %176 = math.tanh %175 : vector<1x32xf32>
    %cst_60 = arith.constant 1.000000e+00 : f32
    %177 = vector.broadcast %cst_60 : f32 to vector<1x32xf32>
    %178 = arith.addf %176, %177 : vector<1x32xf32>
    %cst_61 = arith.constant 5.000000e-01 : f32
    %179 = vector.broadcast %cst_61 : f32 to vector<1x32xf32>
    %180 = arith.mulf %179, %178 : vector<1x32xf32>
    %181 = arith.mulf %170, %149 : vector<1x32xf32>
    %182 = arith.mulf %162, %172 : vector<1x32xf32>
    %183 = arith.addf %181, %182 : vector<1x32xf32>
    %184 = math.tanh %183 : vector<1x32xf32>
    %185 = arith.mulf %180, %184 : vector<1x32xf32>
    %186 = vector.extract_strided_slice %12 {offsets = [5, 0], sizes = [1, 128], strides = [1, 1]} : vector<8x128xf32> to vector<1x128xf32>
    %cst_62 = arith.constant dense<0.000000e+00> : vector<1x128xf32>
    %187 = tpu.matmul %185, %13, %cst_62 {dimension_numbers = #tpu.dot_dimension_numbers<[1], [0], [0], [1], [0, 0, 1, 1], [], []>} : vector<1x32xf32>, vector<32x128xf32>, vector<1x128xf32> -> vector<1x128xf32>
    %188 = arith.addf %186, %187 : vector<1x128xf32>
    %189 = vector.extract_strided_slice %188 {offsets = [0, 0], sizes = [1, 32], strides = [1, 1]} : vector<1x128xf32> to vector<1x32xf32>
    %cst_63 = arith.constant 5.000000e-01 : f32
    %190 = vector.broadcast %cst_63 : f32 to vector<1x32xf32>
    %191 = arith.mulf %190, %189 : vector<1x32xf32>
    %192 = math.tanh %191 : vector<1x32xf32>
    %cst_64 = arith.constant 1.000000e+00 : f32
    %193 = vector.broadcast %cst_64 : f32 to vector<1x32xf32>
    %194 = arith.addf %192, %193 : vector<1x32xf32>
    %cst_65 = arith.constant 5.000000e-01 : f32
    %195 = vector.broadcast %cst_65 : f32 to vector<1x32xf32>
    %196 = arith.mulf %195, %194 : vector<1x32xf32>
    %197 = vector.extract_strided_slice %188 {offsets = [0, 32], sizes = [1, 32], strides = [1, 1]} : vector<1x128xf32> to vector<1x32xf32>
    %cst_66 = arith.constant 5.000000e-01 : f32
    %198 = vector.broadcast %cst_66 : f32 to vector<1x32xf32>
    %199 = arith.mulf %198, %197 : vector<1x32xf32>
    %200 = math.tanh %199 : vector<1x32xf32>
    %cst_67 = arith.constant 1.000000e+00 : f32
    %201 = vector.broadcast %cst_67 : f32 to vector<1x32xf32>
    %202 = arith.addf %200, %201 : vector<1x32xf32>
    %cst_68 = arith.constant 5.000000e-01 : f32
    %203 = vector.broadcast %cst_68 : f32 to vector<1x32xf32>
    %204 = arith.mulf %203, %202 : vector<1x32xf32>
    %205 = vector.extract_strided_slice %188 {offsets = [0, 64], sizes = [1, 32], strides = [1, 1]} : vector<1x128xf32> to vector<1x32xf32>
    %206 = math.tanh %205 : vector<1x32xf32>
    %207 = vector.extract_strided_slice %188 {offsets = [0, 96], sizes = [1, 32], strides = [1, 1]} : vector<1x128xf32> to vector<1x32xf32>
    %cst_69 = arith.constant 5.000000e-01 : f32
    %208 = vector.broadcast %cst_69 : f32 to vector<1x32xf32>
    %209 = arith.mulf %208, %207 : vector<1x32xf32>
    %210 = math.tanh %209 : vector<1x32xf32>
    %cst_70 = arith.constant 1.000000e+00 : f32
    %211 = vector.broadcast %cst_70 : f32 to vector<1x32xf32>
    %212 = arith.addf %210, %211 : vector<1x32xf32>
    %cst_71 = arith.constant 5.000000e-01 : f32
    %213 = vector.broadcast %cst_71 : f32 to vector<1x32xf32>
    %214 = arith.mulf %213, %212 : vector<1x32xf32>
    %215 = arith.mulf %204, %183 : vector<1x32xf32>
    %216 = arith.mulf %196, %206 : vector<1x32xf32>
    %217 = arith.addf %215, %216 : vector<1x32xf32>
    %218 = math.tanh %217 : vector<1x32xf32>
    %219 = arith.mulf %214, %218 : vector<1x32xf32>
    %220 = vector.extract_strided_slice %12 {offsets = [6, 0], sizes = [1, 128], strides = [1, 1]} : vector<8x128xf32> to vector<1x128xf32>
    %cst_72 = arith.constant dense<0.000000e+00> : vector<1x128xf32>
    %221 = tpu.matmul %219, %13, %cst_72 {dimension_numbers = #tpu.dot_dimension_numbers<[1], [0], [0], [1], [0, 0, 1, 1], [], []>} : vector<1x32xf32>, vector<32x128xf32>, vector<1x128xf32> -> vector<1x128xf32>
    %222 = arith.addf %220, %221 : vector<1x128xf32>
    %223 = vector.extract_strided_slice %222 {offsets = [0, 0], sizes = [1, 32], strides = [1, 1]} : vector<1x128xf32> to vector<1x32xf32>
    %cst_73 = arith.constant 5.000000e-01 : f32
    %224 = vector.broadcast %cst_73 : f32 to vector<1x32xf32>
    %225 = arith.mulf %224, %223 : vector<1x32xf32>
    %226 = math.tanh %225 : vector<1x32xf32>
    %cst_74 = arith.constant 1.000000e+00 : f32
    %227 = vector.broadcast %cst_74 : f32 to vector<1x32xf32>
    %228 = arith.addf %226, %227 : vector<1x32xf32>
    %cst_75 = arith.constant 5.000000e-01 : f32
    %229 = vector.broadcast %cst_75 : f32 to vector<1x32xf32>
    %230 = arith.mulf %229, %228 : vector<1x32xf32>
    %231 = vector.extract_strided_slice %222 {offsets = [0, 32], sizes = [1, 32], strides = [1, 1]} : vector<1x128xf32> to vector<1x32xf32>
    %cst_76 = arith.constant 5.000000e-01 : f32
    %232 = vector.broadcast %cst_76 : f32 to vector<1x32xf32>
    %233 = arith.mulf %232, %231 : vector<1x32xf32>
    %234 = math.tanh %233 : vector<1x32xf32>
    %cst_77 = arith.constant 1.000000e+00 : f32
    %235 = vector.broadcast %cst_77 : f32 to vector<1x32xf32>
    %236 = arith.addf %234, %235 : vector<1x32xf32>
    %cst_78 = arith.constant 5.000000e-01 : f32
    %237 = vector.broadcast %cst_78 : f32 to vector<1x32xf32>
    %238 = arith.mulf %237, %236 : vector<1x32xf32>
    %239 = vector.extract_strided_slice %222 {offsets = [0, 64], sizes = [1, 32], strides = [1, 1]} : vector<1x128xf32> to vector<1x32xf32>
    %240 = math.tanh %239 : vector<1x32xf32>
    %241 = vector.extract_strided_slice %222 {offsets = [0, 96], sizes = [1, 32], strides = [1, 1]} : vector<1x128xf32> to vector<1x32xf32>
    %cst_79 = arith.constant 5.000000e-01 : f32
    %242 = vector.broadcast %cst_79 : f32 to vector<1x32xf32>
    %243 = arith.mulf %242, %241 : vector<1x32xf32>
    %244 = math.tanh %243 : vector<1x32xf32>
    %cst_80 = arith.constant 1.000000e+00 : f32
    %245 = vector.broadcast %cst_80 : f32 to vector<1x32xf32>
    %246 = arith.addf %244, %245 : vector<1x32xf32>
    %cst_81 = arith.constant 5.000000e-01 : f32
    %247 = vector.broadcast %cst_81 : f32 to vector<1x32xf32>
    %248 = arith.mulf %247, %246 : vector<1x32xf32>
    %249 = arith.mulf %238, %217 : vector<1x32xf32>
    %250 = arith.mulf %230, %240 : vector<1x32xf32>
    %251 = arith.addf %249, %250 : vector<1x32xf32>
    %252 = math.tanh %251 : vector<1x32xf32>
    %253 = arith.mulf %248, %252 : vector<1x32xf32>
    %254 = vector.extract_strided_slice %12 {offsets = [7, 0], sizes = [1, 128], strides = [1, 1]} : vector<8x128xf32> to vector<1x128xf32>
    %cst_82 = arith.constant dense<0.000000e+00> : vector<1x128xf32>
    %255 = tpu.matmul %253, %13, %cst_82 {dimension_numbers = #tpu.dot_dimension_numbers<[1], [0], [0], [1], [0, 0, 1, 1], [], []>} : vector<1x32xf32>, vector<32x128xf32>, vector<1x128xf32> -> vector<1x128xf32>
    %256 = arith.addf %254, %255 : vector<1x128xf32>
    %257 = vector.extract_strided_slice %256 {offsets = [0, 0], sizes = [1, 32], strides = [1, 1]} : vector<1x128xf32> to vector<1x32xf32>
    %cst_83 = arith.constant 5.000000e-01 : f32
    %258 = vector.broadcast %cst_83 : f32 to vector<1x32xf32>
    %259 = arith.mulf %258, %257 : vector<1x32xf32>
    %260 = math.tanh %259 : vector<1x32xf32>
    %cst_84 = arith.constant 1.000000e+00 : f32
    %261 = vector.broadcast %cst_84 : f32 to vector<1x32xf32>
    %262 = arith.addf %260, %261 : vector<1x32xf32>
    %cst_85 = arith.constant 5.000000e-01 : f32
    %263 = vector.broadcast %cst_85 : f32 to vector<1x32xf32>
    %264 = arith.mulf %263, %262 : vector<1x32xf32>
    %265 = vector.extract_strided_slice %256 {offsets = [0, 32], sizes = [1, 32], strides = [1, 1]} : vector<1x128xf32> to vector<1x32xf32>
    %cst_86 = arith.constant 5.000000e-01 : f32
    %266 = vector.broadcast %cst_86 : f32 to vector<1x32xf32>
    %267 = arith.mulf %266, %265 : vector<1x32xf32>
    %268 = math.tanh %267 : vector<1x32xf32>
    %cst_87 = arith.constant 1.000000e+00 : f32
    %269 = vector.broadcast %cst_87 : f32 to vector<1x32xf32>
    %270 = arith.addf %268, %269 : vector<1x32xf32>
    %cst_88 = arith.constant 5.000000e-01 : f32
    %271 = vector.broadcast %cst_88 : f32 to vector<1x32xf32>
    %272 = arith.mulf %271, %270 : vector<1x32xf32>
    %273 = vector.extract_strided_slice %256 {offsets = [0, 64], sizes = [1, 32], strides = [1, 1]} : vector<1x128xf32> to vector<1x32xf32>
    %274 = math.tanh %273 : vector<1x32xf32>
    %275 = vector.extract_strided_slice %256 {offsets = [0, 96], sizes = [1, 32], strides = [1, 1]} : vector<1x128xf32> to vector<1x32xf32>
    %cst_89 = arith.constant 5.000000e-01 : f32
    %276 = vector.broadcast %cst_89 : f32 to vector<1x32xf32>
    %277 = arith.mulf %276, %275 : vector<1x32xf32>
    %278 = math.tanh %277 : vector<1x32xf32>
    %cst_90 = arith.constant 1.000000e+00 : f32
    %279 = vector.broadcast %cst_90 : f32 to vector<1x32xf32>
    %280 = arith.addf %278, %279 : vector<1x32xf32>
    %cst_91 = arith.constant 5.000000e-01 : f32
    %281 = vector.broadcast %cst_91 : f32 to vector<1x32xf32>
    %282 = arith.mulf %281, %280 : vector<1x32xf32>
    %283 = arith.mulf %272, %251 : vector<1x32xf32>
    %284 = arith.mulf %264, %274 : vector<1x32xf32>
    %285 = arith.addf %283, %284 : vector<1x32xf32>
    %286 = math.tanh %285 : vector<1x32xf32>
    %287 = arith.mulf %282, %286 : vector<1x32xf32>
    %288 = tpu.concatenate %49, %83, %117, %151, %185, %219, %253, %287 in 0 : vector<1x32xf32>, vector<1x32xf32>, vector<1x32xf32>, vector<1x32xf32>, vector<1x32xf32>, vector<1x32xf32>, vector<1x32xf32>, vector<1x32xf32> -> vector<8x32xf32>
    %c0_92 = arith.constant 0 : index
    %c0_93 = arith.constant 0 : index
    %289 = vector.load %arg5[%c0_92, %c0_93] : memref<32x8xf32, #tpu.memory_space<vmem>>, vector<32x8xf32>
    %cst_94 = arith.constant dense<0.000000e+00> : vector<8x8xf32>
    %290 = tpu.matmul %288, %289, %cst_94 {dimension_numbers = #tpu.dot_dimension_numbers<[1], [0], [0], [1], [0, 0, 1, 1], [], []>} : vector<8x32xf32>, vector<32x8xf32>, vector<8x8xf32> -> vector<8x8xf32>
    %c0_95 = arith.constant 0 : index
    %c0_96 = arith.constant 0 : index
    %291 = vector.load %arg6[%c0_95, %c0_96] : memref<1x8xf32, #tpu.memory_space<vmem>>, vector<1x8xf32>
    %292 = vector.broadcast %291 : vector<1x8xf32> to vector<8x8xf32>
    %293 = arith.addf %290, %292 : vector<8x8xf32>
    %cst_97 = arith.constant dense<0xFF800000> : vector<8xf32>
    %294 = vector.multi_reduction <maximumf>, %293, %cst_97 [1] : vector<8x8xf32> to vector<8xf32>
    %295 = vector.shape_cast %294 : vector<8xf32> to vector<8x1xf32>
    %296 = vector.broadcast %295 : vector<8x1xf32> to vector<8x8xf32>
    %297 = arith.subf %293, %296 : vector<8x8xf32>
    %298 = math.exp %297 : vector<8x8xf32>
    %cst_98 = arith.constant dense<0.000000e+00> : vector<8xf32>
    %299 = vector.multi_reduction <add>, %298, %cst_98 [1] : vector<8x8xf32> to vector<8xf32>
    %300 = vector.shape_cast %299 : vector<8xf32> to vector<8x1xf32>
    %301 = math.log %300 : vector<8x1xf32>
    %302 = vector.broadcast %301 : vector<8x1xf32> to vector<8x8xf32>
    %303 = arith.subf %297, %302 : vector<8x8xf32>
    %c0_99 = arith.constant 0 : index
    %c0_100 = arith.constant 0 : index
    %304 = vector.load %arg7[%c0_99, %c0_100] : memref<8x8xf32, #tpu.memory_space<vmem>>, vector<8x8xf32>
    tpu.vector_store %arg7[%c0_99, %c0_100], %303 {strides = array<i32>} : memref<8x8xf32, #tpu.memory_space<vmem>>, vector<8x8xf32>,
    return
  }
}

</mosaic_0001>

<llo_original>
// kernel: lstm_tagger_forward.1
$region0: #{lstm_tagger_forward.1}
  #allocation0 [shape = 'u32[]', space=smem, size = 0x4, offset = 0x4, fixed_abs, tag = 'smem constant byte address 0x4 - core index']
  #allocation1 [shape = 'u32[144,128]{1,0:T(1,128)}', space=vmem, size = 0x12000, scoped, tag = 'internal scratch']
  %s0 = inlined_call_operand.vmem [shape: s32[8,1], index: 0, kind: input, shape index: {}]
  %s1 = inlined_call_operand.hbm [shape: f32[16,32], index: 1, kind: input, shape index: {}]
  %s2 = inlined_call_operand.vmem [shape: f32[32,128], index: 2, kind: input, shape index: {}]
  %s3 = inlined_call_operand.vmem [shape: f32[32,128], index: 3, kind: input, shape index: {}]
  %s4 = inlined_call_operand.vmem [shape: f32[1,128], index: 4, kind: input, shape index: {}]
  %s5 = inlined_call_operand.vmem [shape: f32[32,8], index: 5, kind: input, shape index: {}]
  %s6 = inlined_call_operand.vmem [shape: f32[1,8], index: 6, kind: input, shape index: {}]
  %s7 = inlined_call_operand.hbm [shape: f32[8,8], index: 7, kind: output, shape index: {}]
  %s8 = sld [smem:[#allocation0]]
  $region42: #{lstm_tagger_forward.1} parent=0
    _
  %s10 = ssub.s32 1, %s8
  %s11 = scalar_select 0, %s10, %s8
  $region1: #{lstm_tagger_forward.1} parent=0
    #allocation2 [shape = 'u8[8192]{0}', space=vmem, size = 0x2000, scoped, tag = 'input window, operand 1, single buffered']
    #allocation3 [shape = 's32[1]{0}', space=sflag, size = 0x4, scoped, tag = 'scoped memory for lstm_tagger_forward.1']
    #allocation4 [shape = 's32[1]{0}', space=sflag, size = 0x4, scoped, tag = 'scoped memory for lstm_tagger_forward.1']
    #allocation5 [shape = 'u8[4096]{0}', space=vmem, size = 0x1000, scoped, tag = 'output window, operand 0, single buffered']
    %12 = vsyncpa [#allocation3], 0
    %13 = vsyncpa [#allocation4], 0
    // Predicated region
    $region2: #{lstm_tagger_forward.1} parent=1 // pred_check
      _
    $region3: #{lstm_tagger_forward.1} parent=1 // pred_check_branch
      %15 = sbr.rel (0) target = $region5
    $region4: #{lstm_tagger_forward.1} parent=1 // pred_region
      _
    $region5: #{lstm_tagger_forward.1} parent=1 // pred_fallthru
      _
    // Predicated region
    $region6: #{lstm_tagger_forward.1} parent=1 // pred_check
      _
    $region7: #{lstm_tagger_forward.1} parent=1 // pred_check_branch
      %17 = sbr.rel (0) target = $region9
    $region8: #{lstm_tagger_forward.1} parent=1 // pred_region
      %s19 = ssub.s32 256, 256
      %20 = vsyncadd [#allocation3], %s19
      %s21 = sshll.u32 [#allocation2], 4
      %s22 = int_to_ptr.vmem [resolvable:$true] %s21
      %27 = dma.hbm_to_vmem [thread:$0]  %s1, 256, %s22, [#allocation3], 128, 128, 8
    $region9: #{lstm_tagger_forward.1} parent=1 // pred_fallthru
      _
    // Predicated region
    $region10: #{lstm_tagger_forward.1} parent=1 // pred_check
      _
    $region11: #{lstm_tagger_forward.1} parent=1 // pred_check_branch
      %29 = sbr.rel (0) target = $region13
    $region12: #{lstm_tagger_forward.1} parent=1 // pred_region
      _
    $region13: #{lstm_tagger_forward.1} parent=1 // pred_fallthru
      _
    // Predicated region
    $region14: #{lstm_tagger_forward.1} parent=1 // pred_check
      _
    $region15: #{lstm_tagger_forward.1} parent=1 // pred_check_branch
      %31 = sbr.rel (0) target = $region17
    $region16: #{lstm_tagger_forward.1} parent=1 // pred_region
      _
    $region17: #{lstm_tagger_forward.1} parent=1 // pred_fallthru
      _
    // Predicated region
    $region18: #{lstm_tagger_forward.1} parent=1 // pred_check
      _
    $region19: #{lstm_tagger_forward.1} parent=1 // pred_check_branch
      %33 = sbr.rel (0) target = $region21
    $region20: #{lstm_tagger_forward.1} parent=1 // pred_region
      _
    $region21: #{lstm_tagger_forward.1} parent=1 // pred_fallthru
      _
    // Predicated region
    $region22: #{lstm_tagger_forward.1} parent=1 // pred_check
      _
    $region23: #{lstm_tagger_forward.1} parent=1 // pred_check_branch
      %35 = sbr.rel (0) target = $region25
    $region24: #{lstm_tagger_forward.1} parent=1 // pred_region
      _
    $region25: #{lstm_tagger_forward.1} parent=1 // pred_fallthru
      _
    // Predicated region
    $region26: #{lstm_tagger_forward.1} parent=1 // pred_check
      _
    $region27: #{lstm_tagger_forward.1} parent=1 // pred_check_branch
      %37 = sbr.rel (0) target = $region29
    $region28: #{lstm_tagger_forward.1} parent=1 // pred_region
      _
    $region29: #{lstm_tagger_forward.1} parent=1 // pred_fallthru
      _
    // Predicated region
    $region30: #{lstm_tagger_forward.1} parent=1 // pred_check
      _
    $region31: #{lstm_tagger_forward.1} parent=1 // pred_check_branch
      %39 = sbr.rel (0) target = $region33
    $region32: #{lstm_tagger_forward.1} parent=1 // pred_region
      %40 = dma.done [#allocation3], 256
    $region33: #{lstm_tagger_forward.1} parent=1 // pred_fallthru
      _
    %v41 = vlaneseq
    %v42 = vand.u32 %v41, 127
    %v43 = vld [vmem:[%s0] sm:$0xff]
    %44 = vset.pattern.permute.xlu0 0
    %45 = vperm.xlu0 %44, %v43
    %v46 = vpop.permute.xlu0 %45
    %vm47 = vcmp.eq.s32.totalorder %v46, %v42
    %v48 = vsel %vm47, 1, 0
    %v49 = vcvt.s32.f32 %v48
    %v50 = vld [vmem:[#allocation2] sm:$0xff]
    %v51 = vld [vmem:[#allocation2 + $0x8] sm:$0xff]
    %vm52 = vcmask 130048
    %v54 = vsel %vm52, %v49, 0
    %56 = vmatprep.subr.mxu0 0.0
    %57 = vmatpush1.msra.mxu0 %v50
    %58 = vmatprep.subr.mxu0 0.0
    %59 = vmatpush1.msra.mxu0 %v51
    %60 = vmatprep.subr.mxu0 0.0
    %61 = vmatpush1.msra.mxu0 0.0
    %62 = vmatprep.subr.mxu0 0.0
    %63 = vmatpush1.msra.mxu0 0.0
    %64 = vmatprep.subr.mxu0 0.0
    %65 = vmatpush1.msra.mxu0 0.0
    %66 = vmatprep.subr.mxu0 0.0
    %67 = vmatpush1.msra.mxu0 0.0
    %68 = vmatprep.subr.mxu0 0.0
    %69 = vmatpush1.msra.mxu0 0.0
    %70 = vmatprep.subr.mxu0 0.0
    %71 = vmatpush1.msra.mxu0 0.0
    %72 = vmatprep.subr.mxu0 0.0
    %73 = vmatpush1.msra.mxu0 0.0
    %74 = vmatprep.subr.mxu0 0.0
    %75 = vmatpush1.msra.mxu0 0.0
    %76 = vmatprep.subr.mxu0 0.0
    %77 = vmatpush1.msra.mxu0 0.0
    %78 = vmatprep.subr.mxu0 0.0
    %79 = vmatpush1.msra.mxu0 0.0
    %80 = vmatprep.subr.mxu0 0.0
    %81 = vmatpush1.msra.mxu0 0.0
    %82 = vmatprep.subr.mxu0 0.0
    %83 = vmatpush1.msra.mxu0 0.0
    %84 = vmatprep.subr.mxu0 0.0
    %85 = vmatpush1.msra.mxu0 0.0
    %86 = vmatprep.subr.mxu0 0.0
    %87 = vmatpush1.msra.mxu0 0.0
    %88 = vmatprep.subr.mxu0 0.0
    %89 = vmatpush1.msra.mxu0 0.0
    %90 = vmatprep.subr.mxu0 0.0
    %91 = vmatpush1.msra.mxu0 0.0
    %92 = vmatprep.subr.mxu0 0.0
    %93 = vmatpush1.msra.mxu0 0.0
    %94 = vmatprep.subr.mxu0 0.0
    %95 = vmatpush1.msra.mxu0 0.0
    %96 = vmatprep.subr.mxu0 0.0
    %97 = vmatpush1.msra.mxu0 0.0
    %98 = vmatprep.subr.mxu0 0.0
    %99 = vmatpush1.msra.mxu0 0.0
    %100 = vmatprep.subr.mxu0 0.0
    %101 = vmatpush1.msra.mxu0 0.0
    %102 = vmatprep.subr.mxu0 0.0
    %103 = vmatpush1.msra.mxu0 0.0
    %104 = vmatprep.subr.mxu0 0.0
    %105 = vmatpush1.msra.mxu0 0.0
    %106 = vmatprep.subr.mxu0 0.0
    %107 = vmatpush1.msra.mxu0 0.0
    %108 = vmatprep.subr.mxu0 0.0
    %109 = vmatpush1.msra.mxu0 0.0
    %110 = vmatprep.subr.mxu0 0.0
    %111 = vmatpush1.msra.mxu0 0.0
    %112 = vmatprep.subr.mxu0 0.0
    %113 = vmatpush1.msra.mxu0 0.0
    %114 = vmatprep.subr.mxu0 0.0
    %115 = vmatpush1.msra.mxu0 0.0
    %116 = vmatprep.subr.mxu0 0.0
    %117 = vmatpush1.msra.mxu0 0.0
    %118 = vmatprep.subr.mxu0 0.0
    %119 = vmatpush1.msra.mxu0 0.0
    %120 = vmatprep.mubr.f32.mxu0 0.0
    %121 = vmatmul.mubr.f32.gmra.mrb[0].mxu0 %v54
    %v122 = vpop.f32.mrb[0].mxu0
    %v123 = vadd.f32 0.0, %v122
    %v124 = vpop.f32.mrb[0].mxu0
    %125 = vdwg.mxu0
    %v126 = vld [vmem:[%s2] sm:$0xff]
    %v127 = vld [vmem:[%s2 + $0x8] sm:$0xff]
    %v128 = vld [vmem:[%s2 + $0x10] sm:$0xff]
    %v129 = vld [vmem:[%s2 + $0x18] sm:$0xff]
    %v130 = vld [vmem:[%s4] sm:$0x1]
    %v132 = vlaneseq
    %v133 = vshrl.u32 %v132, 7
    %v134 = vsub.s32 0, %v133
    %v135 = vrot.slane %v130, %v134
    %vm137 = vcmask 261120
    %v139 = vsel %vm137, %v123, 0
    %141 = vmatprep.subr.mxu0 0.0
    %142 = vmatpush1.msra.mxu0 %v126
    %143 = vmatprep.subr.mxu0 0.0
    %144 = vmatpush1.msra.mxu0 %v127
    %145 = vmatprep.subr.mxu0 0.0
    %146 = vmatpush1.msra.mxu0 %v128
    %147 = vmatprep.subr.mxu0 0.0
    %148 = vmatpush1.msra.mxu0 %v129
    %149 = vmatprep.subr.mxu0 0.0
    %150 = vmatpush1.msra.mxu0 0.0
    %151 = vmatprep.subr.mxu0 0.0
    %152 = vmatpush1.msra.mxu0 0.0
    %153 = vmatprep.subr.mxu0 0.0
    %154 = vmatpush1.msra.mxu0 0.0
    %155 = vmatprep.subr.mxu0 0.0
    %156 = vmatpush1.msra.mxu0 0.0
    %157 = vmatprep.subr.mxu0 0.0
    %158 = vmatpush1.msra.mxu0 0.0
    %159 = vmatprep.subr.mxu0 0.0
    %160 = vmatpush1.msra.mxu0 0.0
    %161 = vmatprep.subr.mxu0 0.0
    %162 = vmatpush1.msra.mxu0 0.0
    %163 = vmatprep.subr.mxu0 0.0
    %164 = vmatpush1.msra.mxu0 0.0
    %165 = vmatprep.subr.mxu0 0.0
    %166 = vmatpush1.msra.mxu0 0.0
    %167 = vmatprep.subr.mxu0 0.0
    %168 = vmatpush1.msra.mxu0 0.0
    %169 = vmatprep.subr.mxu0 0.0
    %170 = vmatpush1.msra.mxu0 0.0
    %171 = vmatprep.subr.mxu0 0.0
    %172 = vmatpush1.msra.mxu0 0.0
    %173 = vmatprep.subr.mxu0 0.0
    %174 = vmatpush1.msra.mxu0 0.0
    %175 = vmatprep.subr.mxu0 0.0
    %176 = vmatpush1.msra.mxu0 0.0
    %177 = vmatprep.subr.mxu0 0.0
    %178 = vmatpush1.msra.mxu0 0.0
    %179 = vmatprep.subr.mxu0 0.0
    %180 = vmatpush1.msra.mxu0 0.0
    %181 = vmatprep.subr.mxu0 0.0
    %182 = vmatpush1.msra.mxu0 0.0
    %183 = vmatprep.subr.mxu0 0.0
    %184 = vmatpush1.msra.mxu0 0.0
    %185 = vmatprep.subr.mxu0 0.0
    %186 = vmatpush1.msra.mxu0 0.0
    %187 = vmatprep.subr.mxu0 0.0
    %188 = vmatpush1.msra.mxu0 0.0
    %189 = vmatprep.subr.mxu0 0.0
    %190 = vmatpush1.msra.mxu0 0.0
    %191 = vmatprep.subr.mxu0 0.0
    %192 = vmatpush1.msra.mxu0 0.0
    %193 = vmatprep.subr.mxu0 0.0
    %194 = vmatpush1.msra.mxu0 0.0
    %195 = vmatprep.subr.mxu0 0.0
    %196 = vmatpush1.msra.mxu0 0.0
    %197 = vmatprep.subr.mxu0 0.0
    %198 = vmatpush1.msra.mxu0 0.0
    %199 = vmatprep.subr.mxu0 0.0
    %200 = vmatpush1.msra.mxu0 0.0
    %201 = vmatprep.subr.mxu0 0.0
    %202 = vmatpush1.msra.mxu0 0.0
    %203 = vmatprep.subr.mxu0 0.0
    %204 = vmatpush1.msra.mxu0 0.0
    %205 = vmatprep.mubr.f32.mxu0 0.0
    %206 = vmatmul.mubr.f32.gmra.mrb[0].mxu0 %v139
    %v207 = vpop.f32.mrb[0].mxu0
    %v208 = vadd.f32 %v135, %v207
    %v209 = vpop.f32.mrb[0].mxu0
    %210 = vdwg.mxu0
    %v211 = vld [vmem:[%s3] sm:$0xff]
    %v212 = vld [vmem:[%s3 + $0x8] sm:$0xff]
    %v213 = vld [vmem:[%s3 + $0x10] sm:$0xff]
    %v214 = vld [vmem:[%s3 + $0x18] sm:$0xff]
    %v216 = vsel %vm137, 0.0, 0
    %218 = vmatprep.subr.mxu0 0.0
    %219 = vmatpush1.msra.mxu0 %v211
    %220 = vmatprep.subr.mxu0 0.0
    %221 = vmatpush1.msra.mxu0 %v212
    %222 = vmatprep.subr.mxu0 0.0
    %223 = vmatpush1.msra.mxu0 %v213
    %224 = vmatprep.subr.mxu0 0.0
    %225 = vmatpush1.msra.mxu0 %v214
    %226 = vmatprep.subr.mxu0 0.0
    %227 = vmatpush1.msra.mxu0 0.0
    %228 = vmatprep.subr.mxu0 0.0
    %229 = vmatpush1.msra.mxu0 0.0
    %230 = vmatprep.subr.mxu0 0.0
    %231 = vmatpush1.msra.mxu0 0.0
    %232 = vmatprep.subr.mxu0 0.0
    %233 = vmatpush1.msra.mxu0 0.0
    %234 = vmatprep.subr.mxu0 0.0
    %235 = vmatpush1.msra.mxu0 0.0
    %236 = vmatprep.subr.mxu0 0.0
    %237 = vmatpush1.msra.mxu0 0.0
    %238 = vmatprep.subr.mxu0 0.0
    %239 = vmatpush1.msra.mxu0 0.0
    %240 = vmatprep.subr.mxu0 0.0
    %241 = vmatpush1.msra.mxu0 0.0
    %242 = vmatprep.subr.mxu0 0.0
    %243 = vmatpush1.msra.mxu0 0.0
    %244 = vmatprep.subr.mxu0 0.0
    %245 = vmatpush1.msra.mxu0 0.0
    %246 = vmatprep.subr.mxu0 0.0
    %247 = vmatpush1.msra.mxu0 0.0
    %248 = vmatprep.subr.mxu0 0.0
    %249 = vmatpush1.msra.mxu0 0.0
    %250 = vmatprep.subr.mxu0 0.0
    %251 = vmatpush1.msra.mxu0 0.0
    %252 = vmatprep.subr.mxu0 0.0
    %253 = vmatpush1.msra.mxu0 0.0
    %254 = vmatprep.subr.mxu0 0.0
    %255 = vmatpush1.msra.mxu0 0.0
    %256 = vmatprep.subr.mxu0 0.0
    %257 = vmatpush1.msra.mxu0 0.0
    %258 = vmatprep.subr.mxu0 0.0
    %259 = vmatpush1.msra.mxu0 0.0
    %260 = vmatprep.subr.mxu0 0.0
    %261 = vmatpush1.msra.mxu0 0.0
    %262 = vmatprep.subr.mxu0 0.0
    %263 = vmatpush1.msra.mxu0 0.0
    %264 = vmatprep.subr.mxu0 0.0
    %265 = vmatpush1.msra.mxu0 0.0
    %266 = vmatprep.subr.mxu0 0.0
    %267 = vmatpush1.msra.mxu0 0.0
    %268 = vmatprep.subr.mxu0 0.0
    %269 = vmatpush1.msra.mxu0 0.0
    %270 = vmatprep.subr.mxu0 0.0
    %271 = vmatpush1.msra.mxu0 0.0
    %272 = vmatprep.subr.mxu0 0.0
    %273 = vmatpush1.msra.mxu0 0.0
    %274 = vmatprep.subr.mxu0 0.0
    %275 = vmatpush1.msra.mxu0 0.0
    %276 = vmatprep.subr.mxu0 0.0
    %277 = vmatpush1.msra.mxu0 0.0
    %278 = vmatprep.subr.mxu0 0.0
    %279 = vmatpush1.msra.mxu0 0.0
    %280 = vmatprep.subr.mxu0 0.0
    %281 = vmatpush1.msra.mxu0 0.0
    %282 = vmatprep.mubr.f32.mxu0 0.0
    %283 = vmatmul.mubr.f32.gmra.mrb[0].mxu0 %v216
    %v284 = vpop.f32.mrb[0].mxu0
    %v285 = vadd.f32 0.0, %v284
    %v286 = vpop.f32.mrb[0].mxu0
    %287 = vdwg.mxu0
    %v288 = vadd.f32 %v208, %v285
    %v289 = vmul.f32 %v288, 0.5
    %v290 = vtanh.pop %v289
    %v291 = vadd.f32 %v290, 1.0
    %v292 = vmul.f32 %v291, 0.5
    %v293 = vtanh.pop %v288
    %v294 = vmul.f32 %v292, 0.0
    %296 = vrot.lane.b32.xlu0 %v293, 64
    %v297 = vpop.permute.xlu0 %296
    %v299 = vmul.f32 %v292, %v297
    %301 = vrot.lane.b32.xlu0 %v299, 32
    %v302 = vpop.permute.xlu0 %301
    %v304 = vadd.f32 %v294, %v302
    %v305 = vtanh.pop %v304
    %307 = vrot.lane.b32.xlu0 %v305, 64
    %v308 = vpop.permute.xlu0 %307
    %v310 = vmul.f32 %v292, %v308
    %312 = vrot.lane.b32.xlu0 %v310, 32
    %v313 = vpop.permute.xlu0 %312
    %v314 = vsel %vm137, %v313, 0
    %316 = vmatprep.subr.mxu0 0.0
    %317 = vmatpush1.msra.mxu0 %v211
    %318 = vmatprep.subr.mxu0 0.0
    %319 = vmatpush1.msra.mxu0 %v212
    %320 = vmatprep.subr.mxu0 0.0
    %321 = vmatpush1.msra.mxu0 %v213
    %322 = vmatprep.subr.mxu0 0.0
    %323 = vmatpush1.msra.mxu0 %v214
    %324 = vmatprep.subr.mxu0 0.0
    %325 = vmatpush1.msra.mxu0 0.0
    %326 = vmatprep.subr.mxu0 0.0
    %327 = vmatpush1.msra.mxu0 0.0
    %328 = vmatprep.subr.mxu0 0.0
    %329 = vmatpush1.msra.mxu0 0.0
    %330 = vmatprep.subr.mxu0 0.0
    %331 = vmatpush1.msra.mxu0 0.0
    %332 = vmatprep.subr.mxu0 0.0
    %333 = vmatpush1.msra.mxu0 0.0
    %334 = vmatprep.subr.mxu0 0.0
    %335 = vmatpush1.msra.mxu0 0.0
    %336 = vmatprep.subr.mxu0 0.0
    %337 = vmatpush1.msra.mxu0 0.0
    %338 = vmatprep.subr.mxu0 0.0
    %339 = vmatpush1.msra.mxu0 0.0
    %340 = vmatprep.subr.mxu0 0.0
    %341 = vmatpush1.msra.mxu0 0.0
    %342 = vmatprep.subr.mxu0 0.0
    %343 = vmatpush1.msra.mxu0 0.0
    %344 = vmatprep.subr.mxu0 0.0
    %345 = vmatpush1.msra.mxu0 0.0
    %346 = vmatprep.subr.mxu0 0.0
    %347 = vmatpush1.msra.mxu0 0.0
    %348 = vmatprep.subr.mxu0 0.0
    %349 = vmatpush1.msra.mxu0 0.0
    %350 = vmatprep.subr.mxu0 0.0
    %351 = vmatpush1.msra.mxu0 0.0
    %352 = vmatprep.subr.mxu0 0.0
    %353 = vmatpush1.msra.mxu0 0.0
    %354 = vmatprep.subr.mxu0 0.0
    %355 = vmatpush1.msra.mxu0 0.0
    %356 = vmatprep.subr.mxu0 0.0
    %357 = vmatpush1.msra.mxu0 0.0
    %358 = vmatprep.subr.mxu0 0.0
    %359 = vmatpush1.msra.mxu0 0.0
    %360 = vmatprep.subr.mxu0 0.0
    %361 = vmatpush1.msra.mxu0 0.0
    %362 = vmatprep.subr.mxu0 0.0
    %363 = vmatpush1.msra.mxu0 0.0
    %364 = vmatprep.subr.mxu0 0.0
    %365 = vmatpush1.msra.mxu0 0.0
    %366 = vmatprep.subr.mxu0 0.0
    %367 = vmatpush1.msra.mxu0 0.0
    %368 = vmatprep.subr.mxu0 0.0
    %369 = vmatpush1.msra.mxu0 0.0
    %370 = vmatprep.subr.mxu0 0.0
    %371 = vmatpush1.msra.mxu0 0.0
    %372 = vmatprep.subr.mxu0 0.0
    %373 = vmatpush1.msra.mxu0 0.0
    %374 = vmatprep.subr.mxu0 0.0
    %375 = vmatpush1.msra.mxu0 0.0
    %376 = vmatprep.subr.mxu0 0.0
    %377 = vmatpush1.msra.mxu0 0.0
    %378 = vmatprep.subr.mxu0 0.0
    %379 = vmatpush1.msra.mxu0 0.0
    %380 = vmatprep.mubr.f32.mxu0 0.0
    %381 = vmatmul.mubr.f32.gmra.mrb[0].mxu0 %v314
    %v382 = vpop.f32.mrb[0].mxu0
    %v383 = vadd.f32 0.0, %v382
    %v384 = vpop.f32.mrb[0].mxu0
    %385 = vdwg.mxu0
    %v387 = vrot.slane %v383, 7
    %v389 = vadd.f32 %v208, %v387
    %v390 = vmul.f32 %v389, 0.5
    %v391 = vtanh.pop %v390
    %v392 = vadd.f32 %v391, 1.0
    %v393 = vmul.f32 %v392, 0.5
    %v394 = vtanh.pop %v389
    %v396 = vrot.slane %v304, 7
    %v398 = vmul.f32 %v393, %v396
    %400 = vrot.lane.b32.xlu0 %v394, 64
    %v401 = vpop.permute.xlu0 %400
    %v403 = vmul.f32 %v393, %v401
    %405 = vrot.lane.b32.xlu0 %v403, 32
    %v406 = vpop.permute.xlu0 %405
    %v408 = vadd.f32 %v398, %v406
    %v409 = vtanh.pop %v408
    %411 = vrot.lane.b32.xlu0 %v409, 64
    %v412 = vpop.permute.xlu0 %411
    %v414 = vmul.f32 %v393, %v412
    %v416 = vrot.slane %v414, 1
    %417 = vrot.lane.b32.xlu0 %v416, 32
    %v418 = vpop.permute.xlu0 %417
    %v419 = vsel %vm137, %v418, 0
    %421 = vmatprep.subr.mxu0 0.0
    %422 = vmatpush1.msra.mxu0 %v211
    %423 = vmatprep.subr.mxu0 0.0
    %424 = vmatpush1.msra.mxu0 %v212
    %425 = vmatprep.subr.mxu0 0.0
    %426 = vmatpush1.msra.mxu0 %v213
    %427 = vmatprep.subr.mxu0 0.0
    %428 = vmatpush1.msra.mxu0 %v214
    %429 = vmatprep.subr.mxu0 0.0
    %430 = vmatpush1.msra.mxu0 0.0
    %431 = vmatprep.subr.mxu0 0.0
    %432 = vmatpush1.msra.mxu0 0.0
    %433 = vmatprep.subr.mxu0 0.0
    %434 = vmatpush1.msra.mxu0 0.0
    %435 = vmatprep.subr.mxu0 0.0
    %436 = vmatpush1.msra.mxu0 0.0
    %437 = vmatprep.subr.mxu0 0.0
    %438 = vmatpush1.msra.mxu0 0.0
    %439 = vmatprep.subr.mxu0 0.0
    %440 = vmatpush1.msra.mxu0 0.0
    %441 = vmatprep.subr.mxu0 0.0
    %442 = vmatpush1.msra.mxu0 0.0
    %443 = vmatprep.subr.mxu0 0.0
    %444 = vmatpush1.msra.mxu0 0.0
    %445 = vmatprep.subr.mxu0 0.0
    %446 = vmatpush1.msra.mxu0 0.0
    %447 = vmatprep.subr.mxu0 0.0
    %448 = vmatpush1.msra.mxu0 0.0
    %449 = vmatprep.subr.mxu0 0.0
    %450 = vmatpush1.msra.mxu0 0.0
    %451 = vmatprep.subr.mxu0 0.0
    %452 = vmatpush1.msra.mxu0 0.0
    %453 = vmatprep.subr.mxu0 0.0
    %454 = vmatpush1.msra.mxu0 0.0
    %455 = vmatprep.subr.mxu0 0.0
    %456 = vmatpush1.msra.mxu0 0.0
    %457 = vmatprep.subr.mxu0 0.0
    %458 = vmatpush1.msra.mxu0 0.0
    %459 = vmatprep.subr.mxu0 0.0
    %460 = vmatpush1.msra.mxu0 0.0
    %461 = vmatprep.subr.mxu0 0.0
    %462 = vmatpush1.msra.mxu0 0.0
    %463 = vmatprep.subr.mxu0 0.0
    %464 = vmatpush1.msra.mxu0 0.0
    %465 = vmatprep.subr.mxu0 0.0
    %466 = vmatpush1.msra.mxu0 0.0
    %467 = vmatprep.subr.mxu0 0.0
    %468 = vmatpush1.msra.mxu0 0.0
    %469 = vmatprep.subr.mxu0 0.0
    %470 = vmatpush1.msra.mxu0 0.0
    %471 = vmatprep.subr.mxu0 0.0
    %472 = vmatpush1.msra.mxu0 0.0
    %473 = vmatprep.subr.mxu0 0.0
    %474 = vmatpush1.msra.mxu0 0.0
    %475 = vmatprep.subr.mxu0 0.0
    %476 = vmatpush1.msra.mxu0 0.0
    %477 = vmatprep.subr.mxu0 0.0
    %478 = vmatpush1.msra.mxu0 0.0
    %479 = vmatprep.subr.mxu0 0.0
    %480 = vmatpush1.msra.mxu0 0.0
    %481 = vmatprep.subr.mxu0 0.0
    %482 = vmatpush1.msra.mxu0 0.0
    %483 = vmatprep.subr.mxu0 0.0
    %484 = vmatpush1.msra.mxu0 0.0
    %485 = vmatprep.mubr.f32.mxu0 0.0
    %486 = vmatmul.mubr.f32.gmra.mrb[0].mxu0 %v419
    %v487 = vpop.f32.mrb[0].mxu0
    %v488 = vadd.f32 0.0, %v487
    %v489 = vpop.f32.mrb[0].mxu0
    %490 = vdwg.mxu0
    %v492 = vrot.slane %v488, 6
    %v494 = vadd.f32 %v208, %v492
    %v495 = vmul.f32 %v494, 0.5
    %v496 = vtanh.pop %v495
    %v497 = vadd.f32 %v496, 1.0
    %v498 = vmul.f32 %v497, 0.5
    %v499 = vtanh.pop %v494
    %v501 = vrot.slane %v408, 7
    %v503 = vmul.f32 %v498, %v501
    %505 = vrot.lane.b32.xlu0 %v499, 64
    %v506 = vpop.permute.xlu0 %505
    %v508 = vmul.f32 %v498, %v506
    %510 = vrot.lane.b32.xlu0 %v508, 32
    %v511 = vpop.permute.xlu0 %510
    %v513 = vadd.f32 %v503, %v511
    %v514 = vtanh.pop %v513
    %516 = vrot.lane.b32.xlu0 %v514, 64
    %v517 = vpop.permute.xlu0 %516
    %v519 = vmul.f32 %v498, %v517
    %v521 = vrot.slane %v519, 2
    %522 = vrot.lane.b32.xlu0 %v521, 32
    %v523 = vpop.permute.xlu0 %522
    %v524 = vsel %vm137, %v523, 0
    %526 = vmatprep.subr.mxu0 0.0
    %527 = vmatpush1.msra.mxu0 %v211
    %528 = vmatprep.subr.mxu0 0.0
    %529 = vmatpush1.msra.mxu0 %v212
    %530 = vmatprep.subr.mxu0 0.0
    %531 = vmatpush1.msra.mxu0 %v213
    %532 = vmatprep.subr.mxu0 0.0
    %533 = vmatpush1.msra.mxu0 %v214
    %534 = vmatprep.subr.mxu0 0.0
    %535 = vmatpush1.msra.mxu0 0.0
    %536 = vmatprep.subr.mxu0 0.0
    %537 = vmatpush1.msra.mxu0 0.0
    %538 = vmatprep.subr.mxu0 0.0
    %539 = vmatpush1.msra.mxu0 0.0
    %540 = vmatprep.subr.mxu0 0.0
    %541 = vmatpush1.msra.mxu0 0.0
    %542 = vmatprep.subr.mxu0 0.0
    %543 = vmatpush1.msra.mxu0 0.0
    %544 = vmatprep.subr.mxu0 0.0
    %545 = vmatpush1.msra.mxu0 0.0
    %546 = vmatprep.subr.mxu0 0.0
    %547 = vmatpush1.msra.mxu0 0.0
    %548 = vmatprep.subr.mxu0 0.0
    %549 = vmatpush1.msra.mxu0 0.0
    %550 = vmatprep.subr.mxu0 0.0
    %551 = vmatpush1.msra.mxu0 0.0
    %552 = vmatprep.subr.mxu0 0.0
    %553 = vmatpush1.msra.mxu0 0.0
    %554 = vmatprep.subr.mxu0 0.0
    %555 = vmatpush1.msra.mxu0 0.0
    %556 = vmatprep.subr.mxu0 0.0
    %557 = vmatpush1.msra.mxu0 0.0
    %558 = vmatprep.subr.mxu0 0.0
    %559 = vmatpush1.msra.mxu0 0.0
    %560 = vmatprep.subr.mxu0 0.0
    %561 = vmatpush1.msra.mxu0 0.0
    %562 = vmatprep.subr.mxu0 0.0
    %563 = vmatpush1.msra.mxu0 0.0
    %564 = vmatprep.subr.mxu0 0.0
    %565 = vmatpush1.msra.mxu0 0.0
    %566 = vmatprep.subr.mxu0 0.0
    %567 = vmatpush1.msra.mxu0 0.0
    %568 = vmatprep.subr.mxu0 0.0
    %569 = vmatpush1.msra.mxu0 0.0
    %570 = vmatprep.subr.mxu0 0.0
    %571 = vmatpush1.msra.mxu0 0.0
    %572 = vmatprep.subr.mxu0 0.0
    %573 = vmatpush1.msra.mxu0 0.0
    %574 = vmatprep.subr.mxu0 0.0
    %575 = vmatpush1.msra.mxu0 0.0
    %576 = vmatprep.subr.mxu0 0.0
    %577 = vmatpush1.msra.mxu0 0.0
    %578 = vmatprep.subr.mxu0 0.0
    %579 = vmatpush1.msra.mxu0 0.0
    %580 = vmatprep.subr.mxu0 0.0
    %581 = vmatpush1.msra.mxu0 0.0
    %582 = vmatprep.subr.mxu0 0.0
    %583 = vmatpush1.msra.mxu0 0.0
    %584 = vmatprep.subr.mxu0 0.0
    %585 = vmatpush1.msra.mxu0 0.0
    %586 = vmatprep.subr.mxu0 0.0
    %587 = vmatpush1.msra.mxu0 0.0
    %588 = vmatprep.subr.mxu0 0.0
    %589 = vmatpush1.msra.mxu0 0.0
    %590 = vmatprep.mubr.f32.mxu0 0.0
    %591 = vmatmul.mubr.f32.gmra.mrb[0].mxu0 %v524
    %v592 = vpop.f32.mrb[0].mxu0
    %v593 = vadd.f32 0.0, %v592
    %v594 = vpop.f32.mrb[0].mxu0
    %595 = vdwg.mxu0
    %v597 = vrot.slane %v593, 5
    %v599 = vadd.f32 %v208, %v597
    %v600 = vmul.f32 %v599, 0.5
    %v601 = vtanh.pop %v600
    %v602 = vadd.f32 %v601, 1.0
    %v603 = vmul.f32 %v602, 0.5
    %v604 = vtanh.pop %v599
    %v606 = vrot.slane %v513, 7
    %v608 = vmul.f32 %v603, %v606
    %610 = vrot.lane.b32.xlu0 %v604, 64
    %v611 = vpop.permute.xlu0 %610
    %v613 = vmul.f32 %v603, %v611
    %615 = vrot.lane.b32.xlu0 %v613, 32
    %v616 = vpop.permute.xlu0 %615
    %v618 = vadd.f32 %v608, %v616
    %v619 = vtanh.pop %v618
    %621 = vrot.lane.b32.xlu0 %v619, 64
    %v622 = vpop.permute.xlu0 %621
    %v624 = vmul.f32 %v603, %v622
    %v626 = vrot.slane %v624, 3
    %627 = vrot.lane.b32.xlu0 %v626, 32
    %v628 = vpop.permute.xlu0 %627
    %v629 = vsel %vm137, %v628, 0
    %631 = vmatprep.subr.mxu0 0.0
    %632 = vmatpush1.msra.mxu0 %v211
    %633 = vmatprep.subr.mxu0 0.0
    %634 = vmatpush1.msra.mxu0 %v212
    %635 = vmatprep.subr.mxu0 0.0
    %636 = vmatpush1.msra.mxu0 %v213
    %637 = vmatprep.subr.mxu0 0.0
    %638 = vmatpush1.msra.mxu0 %v214
    %639 = vmatprep.subr.mxu0 0.0
    %640 = vmatpush1.msra.mxu0 0.0
    %641 = vmatprep.subr.mxu0 0.0
    %642 = vmatpush1.msra.mxu0 0.0
    %643 = vmatprep.subr.mxu0 0.0
    %644 = vmatpush1.msra.mxu0 0.0
    %645 = vmatprep.subr.mxu0 0.0
    %646 = vmatpush1.msra.mxu0 0.0
    %647 = vmatprep.subr.mxu0 0.0
    %648 = vmatpush1.msra.mxu0 0.0
    %649 = vmatprep.subr.mxu0 0.0
    %650 = vmatpush1.msra.mxu0 0.0
    %651 = vmatprep.subr.mxu0 0.0
    %652 = vmatpush1.msra.mxu0 0.0
    %653 = vmatprep.subr.mxu0 0.0
    %654 = vmatpush1.msra.mxu0 0.0
    %655 = vmatprep.subr.mxu0 0.0
    %656 = vmatpush1.msra.mxu0 0.0
    %657 = vmatprep.subr.mxu0 0.0
    %658 = vmatpush1.msra.mxu0 0.0
    %659 = vmatprep.subr.mxu0 0.0
    %660 = vmatpush1.msra.mxu0 0.0
    %661 = vmatprep.subr.mxu0 0.0
    %662 = vmatpush1.msra.mxu0 0.0
    %663 = vmatprep.subr.mxu0 0.0
    %664 = vmatpush1.msra.mxu0 0.0
    %665 = vmatprep.subr.mxu0 0.0
    %666 = vmatpush1.msra.mxu0 0.0
    %667 = vmatprep.subr.mxu0 0.0
    %668 = vmatpush1.msra.mxu0 0.0
    %669 = vmatprep.subr.mxu0 0.0
    %670 = vmatpush1.msra.mxu0 0.0
    %671 = vmatprep.subr.mxu0 0.0
    %672 = vmatpush1.msra.mxu0 0.0
    %673 = vmatprep.subr.mxu0 0.0
    %674 = vmatpush1.msra.mxu0 0.0
    %675 = vmatprep.subr.mxu0 0.0
    %676 = vmatpush1.msra.mxu0 0.0
    %677 = vmatprep.subr.mxu0 0.0
    %678 = vmatpush1.msra.mxu0 0.0
    %679 = vmatprep.subr.mxu0 0.0
    %680 = vmatpush1.msra.mxu0 0.0
    %681 = vmatprep.subr.mxu0 0.0
    %682 = vmatpush1.msra.mxu0 0.0
    %683 = vmatprep.subr.mxu0 0.0
    %684 = vmatpush1.msra.mxu0 0.0
    %685 = vmatprep.subr.mxu0 0.0
    %686 = vmatpush1.msra.mxu0 0.0
    %687 = vmatprep.subr.mxu0 0.0
    %688 = vmatpush1.msra.mxu0 0.0
    %689 = vmatprep.subr.mxu0 0.0
    %690 = vmatpush1.msra.mxu0 0.0
    %691 = vmatprep.subr.mxu0 0.0
    %692 = vmatpush1.msra.mxu0 0.0
    %693 = vmatprep.subr.mxu0 0.0
    %694 = vmatpush1.msra.mxu0 0.0
    %695 = vmatprep.mubr.f32.mxu0 0.0
    %696 = vmatmul.mubr.f32.gmra.mrb[0].mxu0 %v629
    %v697 = vpop.f32.mrb[0].mxu0
    %v698 = vadd.f32 0.0, %v697
    %v699 = vpop.f32.mrb[0].mxu0
    %700 = vdwg.mxu0
    %v702 = vrot.slane %v698, 4
    %v704 = vadd.f32 %v208, %v702
    %v705 = vmul.f32 %v704, 0.5
    %v706 = vtanh.pop %v705
    %v707 = vadd.f32 %v706, 1.0
    %v708 = vmul.f32 %v707, 0.5
    %v709 = vtanh.pop %v704
    %v711 = vrot.slane %v618, 7
    %v713 = vmul.f32 %v708, %v711
    %715 = vrot.lane.b32.xlu0 %v709, 64
    %v716 = vpop.permute.xlu0 %715
    %v718 = vmul.f32 %v708, %v716
    %720 = vrot.lane.b32.xlu0 %v718, 32
    %v721 = vpop.permute.xlu0 %720
    %v723 = vadd.f32 %v713, %v721
    %v724 = vtanh.pop %v723
    %726 = vrot.lane.b32.xlu0 %v724, 64
    %v727 = vpop.permute.xlu0 %726
    %v729 = vmul.f32 %v708, %v727
    %v731 = vrot.slane %v729, 4
    %732 = vrot.lane.b32.xlu0 %v731, 32
    %v733 = vpop.permute.xlu0 %732
    %v734 = vsel %vm137, %v733, 0
    %736 = vmatprep.subr.mxu0 0.0
    %737 = vmatpush1.msra.mxu0 %v211
    %738 = vmatprep.subr.mxu0 0.0
    %739 = vmatpush1.msra.mxu0 %v212
    %740 = vmatprep.subr.mxu0 0.0
    %741 = vmatpush1.msra.mxu0 %v213
    %742 = vmatprep.subr.mxu0 0.0
    %743 = vmatpush1.msra.mxu0 %v214
    %744 = vmatprep.subr.mxu0 0.0
    %745 = vmatpush1.msra.mxu0 0.0
    %746 = vmatprep.subr.mxu0 0.0
    %747 = vmatpush1.msra.mxu0 0.0
    %748 = vmatprep.subr.mxu0 0.0
    %749 = vmatpush1.msra.mxu0 0.0
    %750 = vmatprep.subr.mxu0 0.0
    %751 = vmatpush1.msra.mxu0 0.0
    %752 = vmatprep.subr.mxu0 0.0
    %753 = vmatpush1.msra.mxu0 0.0
    %754 = vmatprep.subr.mxu0 0.0
    %755 = vmatpush1.msra.mxu0 0.0
    %756 = vmatprep.subr.mxu0 0.0
    %757 = vmatpush1.msra.mxu0 0.0
    %758 = vmatprep.subr.mxu0 0.0
    %759 = vmatpush1.msra.mxu0 0.0
    %760 = vmatprep.subr.mxu0 0.0
    %761 = vmatpush1.msra.mxu0 0.0
    %762 = vmatprep.subr.mxu0 0.0
    %763 = vmatpush1.msra.mxu0 0.0
    %764 = vmatprep.subr.mxu0 0.0
    %765 = vmatpush1.msra.mxu0 0.0
    %766 = vmatprep.subr.mxu0 0.0
    %767 = vmatpush1.msra.mxu0 0.0
    %768 = vmatprep.subr.mxu0 0.0
    %769 = vmatpush1.msra.mxu0 0.0
    %770 = vmatprep.subr.mxu0 0.0
    %771 = vmatpush1.msra.mxu0 0.0
    %772 = vmatprep.subr.mxu0 0.0
    %773 = vmatpush1.msra.mxu0 0.0
    %774 = vmatprep.subr.mxu0 0.0
    %775 = vmatpush1.msra.mxu0 0.0
    %776 = vmatprep.subr.mxu0 0.0
    %777 = vmatpush1.msra.mxu0 0.0
    %778 = vmatprep.subr.mxu0 0.0
    %779 = vmatpush1.msra.mxu0 0.0
    %780 = vmatprep.subr.mxu0 0.0
    %781 = vmatpush1.msra.mxu0 0.0
    %782 = vmatprep.subr.mxu0 0.0
    %783 = vmatpush1.msra.mxu0 0.0
    %784 = vmatprep.subr.mxu0 0.0
    %785 = vmatpush1.msra.mxu0 0.0
    %786 = vmatprep.subr.mxu0 0.0
    %787 = vmatpush1.msra.mxu0 0.0
    %788 = vmatprep.subr.mxu0 0.0
    %789 = vmatpush1.msra.mxu0 0.0
    %790 = vmatprep.subr.mxu0 0.0
    %791 = vmatpush1.msra.mxu0 0.0
    %792 = vmatprep.subr.mxu0 0.0
    %793 = vmatpush1.msra.mxu0 0.0
    %794 = vmatprep.subr.mxu0 0.0
    %795 = vmatpush1.msra.mxu0 0.0
    %796 = vmatprep.subr.mxu0 0.0
    %797 = vmatpush1.msra.mxu0 0.0
    %798 = vmatprep.subr.mxu0 0.0
    %799 = vmatpush1.msra.mxu0 0.0
    %800 = vmatprep.mubr.f32.mxu0 0.0
    %801 = vmatmul.mubr.f32.gmra.mrb[0].mxu0 %v734
    %v802 = vpop.f32.mrb[0].mxu0
    %v803 = vadd.f32 0.0, %v802
    %v804 = vpop.f32.mrb[0].mxu0
    %805 = vdwg.mxu0
    %v807 = vrot.slane %v803, 3
    %v809 = vadd.f32 %v208, %v807
    %v810 = vmul.f32 %v809, 0.5
    %v811 = vtanh.pop %v810
    %v812 = vadd.f32 %v811, 1.0
    %v813 = vmul.f32 %v812, 0.5
    %v814 = vtanh.pop %v809
    %v816 = vrot.slane %v723, 7
    %v818 = vmul.f32 %v813, %v816
    %820 = vrot.lane.b32.xlu0 %v814, 64
    %v821 = vpop.permute.xlu0 %820
    %v823 = vmul.f32 %v813, %v821
    %825 = vrot.lane.b32.xlu0 %v823, 32
    %v826 = vpop.permute.xlu0 %825
    %v828 = vadd.f32 %v818, %v826
    %v829 = vtanh.pop %v828
    %831 = vrot.lane.b32.xlu0 %v829, 64
    %v832 = vpop.permute.xlu0 %831
    %v834 = vmul.f32 %v813, %v832
    %v836 = vrot.slane %v834, 5
    %837 = vrot.lane.b32.xlu0 %v836, 32
    %v838 = vpop.permute.xlu0 %837
    %v839 = vsel %vm137, %v838, 0
    %841 = vmatprep.subr.mxu0 0.0
    %842 = vmatpush1.msra.mxu0 %v211
    %843 = vmatprep.subr.mxu0 0.0
    %844 = vmatpush1.msra.mxu0 %v212
    %845 = vmatprep.subr.mxu0 0.0
    %846 = vmatpush1.msra.mxu0 %v213
    %847 = vmatprep.subr.mxu0 0.0
    %848 = vmatpush1.msra.mxu0 %v214
    %849 = vmatprep.subr.mxu0 0.0
    %850 = vmatpush1.msra.mxu0 0.0
    %851 = vmatprep.subr.mxu0 0.0
    %852 = vmatpush1.msra.mxu0 0.0
    %853 = vmatprep.subr.mxu0 0.0
    %854 = vmatpush1.msra.mxu0 0.0
    %855 = vmatprep.subr.mxu0 0.0
    %856 = vmatpush1.msra.mxu0 0.0
    %857 = vmatprep.subr.mxu0 0.0
    %858 = vmatpush1.msra.mxu0 0.0
    %859 = vmatprep.subr.mxu0 0.0
    %860 = vmatpush1.msra.mxu0 0.0
    %861 = vmatprep.subr.mxu0 0.0
    %862 = vmatpush1.msra.mxu0 0.0
    %863 = vmatprep.subr.mxu0 0.0
    %864 = vmatpush1.msra.mxu0 0.0
    %865 = vmatprep.subr.mxu0 0.0
    %866 = vmatpush1.msra.mxu0 0.0
    %867 = vmatprep.subr.mxu0 0.0
    %868 = vmatpush1.msra.mxu0 0.0
    %869 = vmatprep.subr.mxu0 0.0
    %870 = vmatpush1.msra.mxu0 0.0
    %871 = vmatprep.subr.mxu0 0.0
    %872 = vmatpush1.msra.mxu0 0.0
    %873 = vmatprep.subr.mxu0 0.0
    %874 = vmatpush1.msra.mxu0 0.0
    %875 = vmatprep.subr.mxu0 0.0
    %876 = vmatpush1.msra.mxu0 0.0
    %877 = vmatprep.subr.mxu0 0.0
    %878 = vmatpush1.msra.mxu0 0.0
    %879 = vmatprep.subr.mxu0 0.0
    %880 = vmatpush1.msra.mxu0 0.0
    %881 = vmatprep.subr.mxu0 0.0
    %882 = vmatpush1.msra.mxu0 0.0
    %883 = vmatprep.subr.mxu0 0.0
    %884 = vmatpush1.msra.mxu0 0.0
    %885 = vmatprep.subr.mxu0 0.0
    %886 = vmatpush1.msra.mxu0 0.0
    %887 = vmatprep.subr.mxu0 0.0
    %888 = vmatpush1.msra.mxu0 0.0
    %889 = vmatprep.subr.mxu0 0.0
    %890 = vmatpush1.msra.mxu0 0.0
    %891 = vmatprep.subr.mxu0 0.0
    %892 = vmatpush1.msra.mxu0 0.0
    %893 = vmatprep.subr.mxu0 0.0
    %894 = vmatpush1.msra.mxu0 0.0
    %895 = vmatprep.subr.mxu0 0.0
    %896 = vmatpush1.msra.mxu0 0.0
    %897 = vmatprep.subr.mxu0 0.0
    %898 = vmatpush1.msra.mxu0 0.0
    %899 = vmatprep.subr.mxu0 0.0
    %900 = vmatpush1.msra.mxu0 0.0
    %901 = vmatprep.subr.mxu0 0.0
    %902 = vmatpush1.msra.mxu0 0.0
    %903 = vmatprep.subr.mxu0 0.0
    %904 = vmatpush1.msra.mxu0 0.0
    %905 = vmatprep.mubr.f32.mxu0 0.0
    %906 = vmatmul.mubr.f32.gmra.mrb[0].mxu0 %v839
    %v907 = vpop.f32.mrb[0].mxu0
    %v908 = vadd.f32 0.0, %v907
    %v909 = vpop.f32.mrb[0].mxu0
    %910 = vdwg.mxu0
    %v912 = vrot.slane %v908, 2
    %v914 = vadd.f32 %v208, %v912
    %v915 = vmul.f32 %v914, 0.5
    %v916 = vtanh.pop %v915
    %v917 = vadd.f32 %v916, 1.0
    %v918 = vmul.f32 %v917, 0.5
    %v919 = vtanh.pop %v914
    %v921 = vrot.slane %v828, 7
    %v923 = vmul.f32 %v918, %v921
    %925 = vrot.lane.b32.xlu0 %v919, 64
    %v926 = vpop.permute.xlu0 %925
    %v928 = vmul.f32 %v918, %v926
    %930 = vrot.lane.b32.xlu0 %v928, 32
    %v931 = vpop.permute.xlu0 %930
    %v933 = vadd.f32 %v923, %v931
    %v934 = vtanh.pop %v933
    %936 = vrot.lane.b32.xlu0 %v934, 64
    %v937 = vpop.permute.xlu0 %936
    %v939 = vmul.f32 %v918, %v937
    %v941 = vrot.slane %v939, 6
    %942 = vrot.lane.b32.xlu0 %v941, 32
    %v943 = vpop.permute.xlu0 %942
    %v944 = vsel %vm137, %v943, 0
    %946 = vmatprep.subr.mxu0 0.0
    %947 = vmatpush1.msra.mxu0 %v211
    %948 = vmatprep.subr.mxu0 0.0
    %949 = vmatpush1.msra.mxu0 %v212
    %950 = vmatprep.subr.mxu0 0.0
    %951 = vmatpush1.msra.mxu0 %v213
    %952 = vmatprep.subr.mxu0 0.0
    %953 = vmatpush1.msra.mxu0 %v214
    %954 = vmatprep.subr.mxu0 0.0
    %955 = vmatpush1.msra.mxu0 0.0
    %956 = vmatprep.subr.mxu0 0.0
    %957 = vmatpush1.msra.mxu0 0.0
    %958 = vmatprep.subr.mxu0 0.0
    %959 = vmatpush1.msra.mxu0 0.0
    %960 = vmatprep.subr.mxu0 0.0
    %961 = vmatpush1.msra.mxu0 0.0
    %962 = vmatprep.subr.mxu0 0.0
    %963 = vmatpush1.msra.mxu0 0.0
    %964 = vmatprep.subr.mxu0 0.0
    %965 = vmatpush1.msra.mxu0 0.0
    %966 = vmatprep.subr.mxu0 0.0
    %967 = vmatpush1.msra.mxu0 0.0
    %968 = vmatprep.subr.mxu0 0.0
    %969 = vmatpush1.msra.mxu0 0.0
    %970 = vmatprep.subr.mxu0 0.0
    %971 = vmatpush1.msra.mxu0 0.0
    %972 = vmatprep.subr.mxu0 0.0
    %973 = vmatpush1.msra.mxu0 0.0
    %974 = vmatprep.subr.mxu0 0.0
    %975 = vmatpush1.msra.mxu0 0.0
    %976 = vmatprep.subr.mxu0 0.0
    %977 = vmatpush1.msra.mxu0 0.0
    %978 = vmatprep.subr.mxu0 0.0
    %979 = vmatpush1.msra.mxu0 0.0
    %980 = vmatprep.subr.mxu0 0.0
    %981 = vmatpush1.msra.mxu0 0.0
    %982 = vmatprep.subr.mxu0 0.0
    %983 = vmatpush1.msra.mxu0 0.0
    %984 = vmatprep.subr.mxu0 0.0
    %985 = vmatpush1.msra.mxu0 0.0
    %986 = vmatprep.subr.mxu0 0.0
    %987 = vmatpush1.msra.mxu0 0.0
    %988 = vmatprep.subr.mxu0 0.0
    %989 = vmatpush1.msra.mxu0 0.0
    %990 = vmatprep.subr.mxu0 0.0
    %991 = vmatpush1.msra.mxu0 0.0
    %992 = vmatprep.subr.mxu0 0.0
    %993 = vmatpush1.msra.mxu0 0.0
    %994 = vmatprep.subr.mxu0 0.0
    %995 = vmatpush1.msra.mxu0 0.0
    %996 = vmatprep.subr.mxu0 0.0
    %997 = vmatpush1.msra.mxu0 0.0
    %998 = vmatprep.subr.mxu0 0.0
    %999 = vmatpush1.msra.mxu0 0.0
    %1000 = vmatprep.subr.mxu0 0.0
    %1001 = vmatpush1.msra.mxu0 0.0
    %1002 = vmatprep.subr.mxu0 0.0
    %1003 = vmatpush1.msra.mxu0 0.0
    %1004 = vmatprep.subr.mxu0 0.0
    %1005 = vmatpush1.msra.mxu0 0.0
    %1006 = vmatprep.subr.mxu0 0.0
    %1007 = vmatpush1.msra.mxu0 0.0
    %1008 = vmatprep.subr.mxu0 0.0
    %1009 = vmatpush1.msra.mxu0 0.0
    %1010 = vmatprep.mubr.f32.mxu0 0.0
    %1011 = vmatmul.mubr.f32.gmra.mrb[0].mxu0 %v944
    %v1012 = vpop.f32.mrb[0].mxu0
    %v1013 = vadd.f32 0.0, %v1012
    %v1014 = vpop.f32.mrb[0].mxu0
    %1015 = vdwg.mxu0
    %v1017 = vrot.slane %v1013, 1
    %v1019 = vadd.f32 %v208, %v1017
    %v1020 = vmul.f32 %v1019, 0.5
    %v1021 = vtanh.pop %v1020
    %v1022 = vadd.f32 %v1021, 1.0
    %v1023 = vmul.f32 %v1022, 0.5
    %v1024 = vtanh.pop %v1019
    %v1026 = vrot.slane %v933, 7
    %v1028 = vmul.f32 %v1023, %v1026
    %1030 = vrot.lane.b32.xlu0 %v1024, 64
    %v1031 = vpop.permute.xlu0 %1030
    %v1033 = vmul.f32 %v1023, %v1031
    %1035 = vrot.lane.b32.xlu0 %v1033, 32
    %v1036 = vpop.permute.xlu0 %1035
    %v1038 = vadd.f32 %v1028, %v1036
    %v1039 = vtanh.pop %v1038
    %1041 = vrot.lane.b32.xlu0 %v1039, 64
    %v1042 = vpop.permute.xlu0 %1041
    %v1044 = vmul.f32 %v1023, %v1042
    %vm1045 = vcmask 1040384
    %v1046 = vsel %vm1045, %v310, %v414
    %vm1047 = vcmask 1041408
    %v1048 = vsel %vm1047, %v1046, %v519
    %vm1049 = vcmask 1042432
    %v1050 = vsel %vm1049, %v1048, %v624
    %vm1051 = vcmask 1043456
    %v1052 = vsel %vm1051, %v1050, %v729
    %vm1053 = vcmask 1044480
    %v1054 = vsel %vm1053, %v1052, %v834
    %vm1055 = vcmask 1045504
    %v1056 = vsel %vm1055, %v1054, %v939
    %vm1057 = vcmask 1046528
    %v1058 = vsel %vm1057, %v1056, %v1044
    %v1059 = vld [vmem:[%s5] sm:$0xff]
    %v1060 = vld [vmem:[%s5 + $0x8] sm:$0xff]
    %v1061 = vld [vmem:[%s5 + $0x10] sm:$0xff]
    %v1062 = vld [vmem:[%s5 + $0x18] sm:$0xff]
    %v1063 = vld [vmem:[%s6] sm:$0x1]
    %v1065 = vlaneseq
    %v1066 = vshrl.u32 %v1065, 7
    %v1067 = vsub.s32 0, %v1066
    %v1068 = vrot.slane %v1063, %v1067
    %1071 = vrot.lane.b32.xlu0 %v1058, 32
    %v1072 = vpop.permute.xlu0 %1071
    %v1073 = vsel %vm137, %v1072, 0
    %1075 = vmatprep.subr.mxu0 0.0
    %1076 = vmatpush1.msra.mxu0 %v1059
    %1077 = vmatprep.subr.mxu0 0.0
    %1078 = vmatpush1.msra.mxu0 %v1060
    %1079 = vmatprep.subr.mxu0 0.0
    %1080 = vmatpush1.msra.mxu0 %v1061
    %1081 = vmatprep.subr.mxu0 0.0
    %1082 = vmatpush1.msra.mxu0 %v1062
    %1083 = vmatprep.subr.mxu0 0.0
    %1084 = vmatpush1.msra.mxu0 0.0
    %1085 = vmatprep.subr.mxu0 0.0
    %1086 = vmatpush1.msra.mxu0 0.0
    %1087 = vmatprep.subr.mxu0 0.0
    %1088 = vmatpush1.msra.mxu0 0.0
    %1089 = vmatprep.subr.mxu0 0.0
    %1090 = vmatpush1.msra.mxu0 0.0
    %1091 = vmatprep.subr.mxu0 0.0
    %1092 = vmatpush1.msra.mxu0 0.0
    %1093 = vmatprep.subr.mxu0 0.0
    %1094 = vmatpush1.msra.mxu0 0.0
    %1095 = vmatprep.subr.mxu0 0.0
    %1096 = vmatpush1.msra.mxu0 0.0
    %1097 = vmatprep.subr.mxu0 0.0
    %1098 = vmatpush1.msra.mxu0 0.0
    %1099 = vmatprep.subr.mxu0 0.0
    %1100 = vmatpush1.msra.mxu0 0.0
    %1101 = vmatprep.subr.mxu0 0.0
    %1102 = vmatpush1.msra.mxu0 0.0
    %1103 = vmatprep.subr.mxu0 0.0
    %1104 = vmatpush1.msra.mxu0 0.0
    %1105 = vmatprep.subr.mxu0 0.0
    %1106 = vmatpush1.msra.mxu0 0.0
    %1107 = vmatprep.subr.mxu0 0.0
    %1108 = vmatpush1.msra.mxu0 0.0
    %1109 = vmatprep.subr.mxu0 0.0
    %1110 = vmatpush1.msra.mxu0 0.0
    %1111 = vmatprep.subr.mxu0 0.0
    %1112 = vmatpush1.msra.mxu0 0.0
    %1113 = vmatprep.subr.mxu0 0.0
    %1114 = vmatpush1.msra.mxu0 0.0
    %1115 = vmatprep.subr.mxu0 0.0
    %1116 = vmatpush1.msra.mxu0 0.0
    %1117 = vmatprep.subr.mxu0 0.0
    %1118 = vmatpush1.msra.mxu0 0.0
    %1119 = vmatprep.subr.mxu0 0.0
    %1120 = vmatpush1.msra.mxu0 0.0
    %1121 = vmatprep.subr.mxu0 0.0
    %1122 = vmatpush1.msra.mxu0 0.0
    %1123 = vmatprep.subr.mxu0 0.0
    %1124 = vmatpush1.msra.mxu0 0.0
    %1125 = vmatprep.subr.mxu0 0.0
    %1126 = vmatpush1.msra.mxu0 0.0
    %1127 = vmatprep.subr.mxu0 0.0
    %1128 = vmatpush1.msra.mxu0 0.0
    %1129 = vmatprep.subr.mxu0 0.0
    %1130 = vmatpush1.msra.mxu0 0.0
    %1131 = vmatprep.subr.mxu0 0.0
    %1132 = vmatpush1.msra.mxu0 0.0
    %1133 = vmatprep.subr.mxu0 0.0
    %1134 = vmatpush1.msra.mxu0 0.0
    %1135 = vmatprep.subr.mxu0 0.0
    %1136 = vmatpush1.msra.mxu0 0.0
    %1137 = vmatprep.subr.mxu0 0.0
    %1138 = vmatpush1.msra.mxu0 0.0
    %1139 = vmatprep.mubr.f32.mxu0 0.0
    %1140 = vmatmul.mubr.f32.gmra.mrb[0].mxu0 %v1073
    %v1141 = vpop.f32.mrb[0].mxu0
    %v1142 = vadd.f32 %v1068, %v1141
    %v1143 = vpop.f32.mrb[0].mxu0
    %1144 = vdwg.mxu0
    %vm1145 = vcmask 64512
    %v1146 = vsel %vm1145, %v1142, -inf
    %1147 = vmax.xlane.f32.xlu0 %v1146
    %v1148 = vpop.xlane.xlu0 %1147
    %v1149 = vsub.f32 %v1142, %v1148
    %v1150 = vmul.f32 %v1149, 1.442695
    %v1151 = vpow.pop %v1150
    %v1152 = vsel %vm1145, %v1151, 0.0
    %1153 = vadd.xlane.f32.xlu0 %v1152
    %v1154 = vpop.xlane.xlu0 %1153
    %v1155 = vlog2.pop %v1154
    %v1156 = vmul.f32 %v1155, 0.6931472
    %v1157 = vsub.f32 %v1149, %v1156
    %1158 = vst.msk [vmem:[#allocation5] sm:$0xff] %vm1145, %v1157
    // Predicated region
    $region34: #{lstm_tagger_forward.1} parent=1 // pred_check
      _
    $region35: #{lstm_tagger_forward.1} parent=1 // pred_check_branch
      %1160 = sbr.rel (0) target = $region37
    $region36: #{lstm_tagger_forward.1} parent=1 // pred_region
      %s1162 = ssub.s32 128, 128
      %1163 = vsyncadd [#allocation4], %s1162
      %s1165 = sshll.u32 [#allocation5], 4
      %s1166 = int_to_ptr.vmem [resolvable:$true] %s1165
      %1168 = dma.vmem_to_hbm [thread:$0]  %s1166, 128, %s7, [#allocation4]
    $region37: #{lstm_tagger_forward.1} parent=1 // pred_fallthru
      _
    // Predicated region
    $region38: #{lstm_tagger_forward.1} parent=1 // pred_check
      _
    $region39: #{lstm_tagger_forward.1} parent=1 // pred_check_branch
      %1170 = sbr.rel (0) target = $region41
    $region40: #{lstm_tagger_forward.1} parent=1 // pred_region
      %1171 = dma.done [#allocation4], 128
    $region41: #{lstm_tagger_forward.1} parent=1 // pred_fallthru
      _
    %1172 = vsyncpa [#allocation3], 1
    %1173 = vsyncpa [#allocation4], 1

</llo_original>
